<compile_context>
chip_gen: v7x
topology: tpu7x:2x2x1
jax: 0.10.0
libtpu: 0.0.40
codegen_flags: <defaults>
</compile_context>

<pallas_src>
import functools

import jax
import jax.numpy as jnp
import numpy as np
from jax import lax
from jax.experimental import pallas as pl
from jax.experimental.pallas import tpu as pltpu

EPS = 1e-5  # nn.LayerNorm default eps

# Cast MXU operands to bf16 on v6e/v7x for ~2-4x MXU rate and half the weight
# VMEM footprint (keep VPU/LayerNorm math in f32 — required on v5e).  Kept at
# f32 here so the demo matches the f32 reference at tight tolerance; loosen
# the assert tolerance (~3e-2) if flipped to bf16.
MXU_DTYPE = jnp.float32


def _mx(a):
    return a.astype(MXU_DTYPE)


def _layernorm(h, gamma, beta):
    # Single-pass LN: mean and mean-of-squares reductions are independent
    # (issue concurrently); var = E[x^2] - mu^2.  rsqrt -> EUP.
    mu = jnp.mean(h, axis=-1, keepdims=True)
    ms = jnp.mean(h * h, axis=-1, keepdims=True)
    return (h - mu) * lax.rsqrt(ms - mu * mu + EPS) * gamma + beta


# ----------------------------- fused kernel ----------------------------------


def _fused_forward_kernel(x_ref, w_in_ref, b_in_ref, g0_ref, be0_ref,
                          wqkv_ref, bqkv_ref, g_ref, be_ref,
                          w_out_ref, b_out_ref, o_ref,
                          *, num_layers, num_heads, head_dim, alpha):
    x = x_ref[...]
    n = x.shape[0]
    hm = num_heads * head_dim
    inv_heads = 1.0 / float(num_heads)

    # ---- fcs[0] -> LayerNorm -> ReLU ----------------------------------------
    h = (jnp.dot(_mx(x), _mx(w_in_ref[...]), preferred_element_type=jnp.float32)
         + b_in_ref[...])
    h = jnp.maximum(_layernorm(h, g0_ref[...], be0_ref[...]), 0.0)
    prev = h

    # ---- DIFFormerConv layers (statically unrolled, weights VMEM-resident) --
    for l in range(num_layers):
        qkv = (jnp.dot(_mx(h), _mx(wqkv_ref[l]), preferred_element_type=jnp.float32)
               + bqkv_ref[l])                                      # [N, 3*HM]
        q = qkv[:, 0 * hm:1 * hm]
        k = qkv[:, 1 * hm:2 * hm]
        v = qkv[:, 2 * hm:3 * hm]

        # Global Frobenius normalisation of q and k folded into one scalar
        # (matches torch.norm(qs, p=2) over the whole tensor); applied to the
        # q@KV product and the denominator instead of scaling q/k elementwise.
        scale = (lax.rsqrt(jnp.sum(q * q) + 1e-12)
                 * lax.rsqrt(jnp.sum(k * k) + 1e-12))

        # Per-head attention, statically unrolled over heads.  Equivalent to
        # the head-batched einsums 'lhm,lhd->hmd' / 'nhm,hmd->nhd' but with
        # plain 2-D matmuls (no block-diagonal mask, no lane reshapes).
        acc = jnp.zeros((n, head_dim), jnp.float32)
        for hd in range(num_heads):
            sl = slice(hd * head_dim, (hd + 1) * head_dim)
            q_h, k_h, v_h = q[:, sl], k[:, sl], v[:, sl]           # [N, M]
            # K_h^T V_h contracted over nodes (no explicit transpose).
            kv_h = lax.dot_general(_mx(k_h), _mx(v_h), (((0,), (0,)), ((), ())),
                                   preferred_element_type=jnp.float32)  # [M, M]
            v_sum_h = jnp.sum(v_h, axis=0, keepdims=True)          # [1, M]
            k_sum_h = jnp.sum(k_h, axis=0, keepdims=True)          # [1, M]
            num_h = (jnp.dot(_mx(q_h), _mx(kv_h),
                             preferred_element_type=jnp.float32) * scale
                     + v_sum_h)                                    # [N, M]
            den_h = (jnp.sum(q_h * k_sum_h, axis=-1, keepdims=True) * scale
                     + float(n))                                   # [N, 1]
            acc = acc + num_h * pl.reciprocal(den_h, approx=True)  # EUP recip
        attn_out = acc * inv_heads                                 # head mean

        h = _layernorm(alpha * attn_out + (1.0 - alpha) * prev,
                       g_ref[l], be_ref[l])
        prev = h

    # ---- fcs[-1] (lane-padded output => unmasked stores; sliced outside) ----
    o_ref[...] = (jnp.dot(_mx(h), _mx(w_out_ref[...]),
                          preferred_element_type=jnp.float32) + b_out_ref[...])


# ----------------------------- model wrapper ---------------------------------


def init_params(key, in_channels, hidden, out_channels, num_layers, num_heads):
    def nrm(k, shape, scale=0.1):
        return (scale * jax.random.normal(k, shape)).astype(jnp.float32)

    hm = hidden * num_heads
    keys = jax.random.split(key, 6 + 4 * num_layers)
    ki = iter(keys)
    p = {
        "w_in": nrm(next(ki), (in_channels, hidden)),
        "b_in": nrm(next(ki), (1, hidden)),
        "g0": jnp.ones((1, hidden), jnp.float32) + nrm(next(ki), (1, hidden), 0.01),
        "be0": nrm(next(ki), (1, hidden), 0.01),
    }
    wqkv, bqkv, g, be = [], [], [], []
    for _ in range(num_layers):
        wqkv.append(nrm(next(ki), (hidden, 3 * hm)))   # [q | k | v], head-major
        bqkv.append(nrm(next(ki), (1, 3 * hm)))
        g.append(jnp.ones((1, hidden), jnp.float32) + nrm(next(ki), (1, hidden), 0.01))
        be.append(nrm(next(ki), (1, hidden), 0.01))
    p["wqkv"] = jnp.stack(wqkv)     # [L, hidden, 3*H*M]
    p["bqkv"] = jnp.stack(bqkv)     # [L, 1, 3*H*M]
    p["g"] = jnp.stack(g)           # [L, 1, hidden]
    p["be"] = jnp.stack(be)         # [L, 1, hidden]
    p["w_out"] = nrm(next(ki), (hidden, out_channels))
    p["b_out"] = nrm(next(ki), (1, out_channels))
    return p


def difformer_forward(x, params, *, num_heads, alpha):
    n = x.shape[0]
    hidden = params["w_in"].shape[1]
    out_ch = params["w_out"].shape[1]
    num_layers = params["wqkv"].shape[0]

    # Lane-dense padded output projection (unmasked stores in the kernel).
    out_pad = max(128, ((out_ch + 127) // 128) * 128)
    w_out_p = jnp.zeros((hidden, out_pad), jnp.float32).at[:, :out_ch].set(params["w_out"])
    b_out_p = jnp.zeros((1, out_pad), jnp.float32).at[:, :out_ch].set(params["b_out"])

    inputs = [x, params["w_in"], params["b_in"], params["g0"], params["be0"],
              params["wqkv"], params["bqkv"], params["g"], params["be"],
              w_out_p, b_out_p]

    kernel = functools.partial(_fused_forward_kernel,
                               num_layers=int(num_layers), num_heads=num_heads,
                               head_dim=hidden, alpha=alpha)

    # No grid: single invocation, every operand a whole-array VMEM ref
    # (no dead 1-trip pipeline, no double-buffered copies of the weight stack).
    vmem_spec = pl.BlockSpec(memory_space=pltpu.MemorySpace.VMEM)
    out = pl.pallas_call(
        kernel,
        out_shape=jax.ShapeDtypeStruct((n, out_pad), jnp.float32),
        in_specs=[vmem_spec] * len(inputs),
        out_specs=vmem_spec,
        compiler_params=pltpu.CompilerParams(
            # Raise the scoped-VMEM cap above the conservative defaults so the
            # all-resident design can scale; keep headroom vs. physical VMEM.
            vmem_limit_bytes=48 * 1024 * 1024),
    )(*inputs)
    return out[:, :out_ch]


# ----------------------------- pure-JAX reference ----------------------------


def reference_forward(x, p, *, num_heads, alpha):
    def ln(h, g, b):
        mu = h.mean(-1, keepdims=True)
        var = ((h - mu) ** 2).mean(-1, keepdims=True)
        return (h - mu) / jnp.sqrt(var + EPS) * g + b

    hidden = p["w_in"].shape[1]
    hm = hidden * num_heads
    h = x @ p["w_in"] + p["b_in"]
    h = jnp.maximum(ln(h, p["g0"], p["be0"]), 0.0)
    prev = h
    for l in range(p["wqkv"].shape[0]):
        qkv = h @ p["wqkv"][l] + p["bqkv"][l]
        q, k, v = qkv[:, :hm], qkv[:, hm:2 * hm], qkv[:, 2 * hm:]
        n = q.shape[0]
        qs = (q / jnp.linalg.norm(q)).reshape(n, num_heads, hidden)
        ks = (k / jnp.linalg.norm(k)).reshape(n, num_heads, hidden)
        vs = v.reshape(n, num_heads, hidden)
        kvs = jnp.einsum("lhm,lhd->hmd", ks, vs)
        num = jnp.einsum("nhm,hmd->nhd", qs, kvs) + vs.sum(0)[None]
        denom = jnp.einsum("nhm,hm->nh", qs, ks.sum(0))[..., None] + n
        out = (num / denom).mean(axis=1)
        h = ln(alpha * out + (1.0 - alpha) * prev, p["g"][l], p["be"][l])
        prev = h
    return h @ p["w_out"] + p["b_out"]


# ----------------------------- main -------------------------------------------


if __name__ == "__main__":
    N = 16            # number of nodes
    IN_CH = 16        # input feature dim
    HIDDEN = 32       # hidden_channels (== per-head out_channels of conv)
    OUT_CH = 4        # output classes
    NUM_LAYERS = 2
    NUM_HEADS = 2
    ALPHA = 0.5

    key = jax.random.PRNGKey(0)
    kx, kp = jax.random.split(key)
    x = jax.random.normal(kx, (N, IN_CH), dtype=jnp.float32)
    params = init_params(kp, IN_CH, HIDDEN, OUT_CH, NUM_LAYERS, NUM_HEADS)

    y = difformer_forward(x, params, num_heads=NUM_HEADS, alpha=ALPHA)
    y = jax.block_until_ready(y)

    y_ref = reference_forward(x, params, num_heads=NUM_HEADS, alpha=ALPHA)
    y_ref = jax.block_until_ready(y_ref)

    # Tolerance accounts for EUP approx-reciprocal / rsqrt and the fused
    # single-pass LayerNorm in the kernel (exact ops in the reference).
    np.testing.assert_allclose(np.asarray(y), np.asarray(y_ref),
                               rtol=3e-3, atol=3e-3)
    print("KERNEL_OK")
</pallas_src>

<mosaic_0001>
module attributes {stable_mosaic.version = 11 : i64} {
  func.func @_fused_forward_kernel(%arg0: memref<16x16xf32, #tpu.memory_space<vmem>>, %arg1: memref<16x32xf32, #tpu.memory_space<vmem>>, %arg2: memref<1x32xf32, #tpu.memory_space<vmem>>, %arg3: memref<1x32xf32, #tpu.memory_space<vmem>>, %arg4: memref<1x32xf32, #tpu.memory_space<vmem>>, %arg5: memref<2x32x192xf32, #tpu.memory_space<vmem>>, %arg6: memref<2x1x192xf32, #tpu.memory_space<vmem>>, %arg7: memref<2x1x32xf32, #tpu.memory_space<vmem>>, %arg8: memref<2x1x32xf32, #tpu.memory_space<vmem>>, %arg9: memref<32x128xf32, #tpu.memory_space<vmem>>, %arg10: memref<1x128xf32, #tpu.memory_space<vmem>>, %arg11: memref<16x128xf32, #tpu.memory_space<vmem>>) attributes {dimension_semantics = [], scalar_prefetch = 0 : i64, scratch_operands = 0 : i64, tpu.core_type = #tpu.core_type<tc>} {
    %c0 = arith.constant 0 : index
    %c0_0 = arith.constant 0 : index
    %0 = vector.load %arg0[%c0, %c0_0] : memref<16x16xf32, #tpu.memory_space<vmem>>, vector<16x16xf32>
    %c0_1 = arith.constant 0 : index
    %c0_2 = arith.constant 0 : index
    %1 = vector.load %arg1[%c0_1, %c0_2] : memref<16x32xf32, #tpu.memory_space<vmem>>, vector<16x32xf32>
    %cst = arith.constant dense<0.000000e+00> : vector<16x32xf32>
    %2 = tpu.matmul %0, %1, %cst {dimension_numbers = #tpu.dot_dimension_numbers<[1], [0], [0], [1], [0, 0, 1, 1], [], []>} : vector<16x16xf32>, vector<16x32xf32>, vector<16x32xf32> -> vector<16x32xf32>
    %c0_3 = arith.constant 0 : index
    %c0_4 = arith.constant 0 : index
    %3 = vector.load %arg2[%c0_3, %c0_4] : memref<1x32xf32, #tpu.memory_space<vmem>>, vector<1x32xf32>
    %4 = vector.broadcast %3 : vector<1x32xf32> to vector<16x32xf32>
    %5 = arith.addf %2, %4 : vector<16x32xf32>
    %c0_5 = arith.constant 0 : index
    %c0_6 = arith.constant 0 : index
    %6 = vector.load %arg3[%c0_5, %c0_6] : memref<1x32xf32, #tpu.memory_space<vmem>>, vector<1x32xf32>
    %c0_7 = arith.constant 0 : index
    %c0_8 = arith.constant 0 : index
    %7 = vector.load %arg4[%c0_7, %c0_8] : memref<1x32xf32, #tpu.memory_space<vmem>>, vector<1x32xf32>
    %cst_9 = arith.constant dense<0.000000e+00> : vector<16xf32>
    %8 = vector.multi_reduction <add>, %5, %cst_9 [1] : vector<16x32xf32> to vector<16xf32>
    %9 = vector.shape_cast %8 : vector<16xf32> to vector<16x1xf32>
    %cst_10 = arith.constant 3.200000e+01 : f32
    %10 = vector.broadcast %cst_10 : f32 to vector<16x1xf32>
    %11 = arith.divf %9, %10 : vector<16x1xf32>
    %12 = arith.mulf %5, %5 : vector<16x32xf32>
    %cst_11 = arith.constant dense<0.000000e+00> : vector<16xf32>
    %13 = vector.multi_reduction <add>, %12, %cst_11 [1] : vector<16x32xf32> to vector<16xf32>
    %14 = vector.shape_cast %13 : vector<16xf32> to vector<16x1xf32>
    %cst_12 = arith.constant 3.200000e+01 : f32
    %15 = vector.broadcast %cst_12 : f32 to vector<16x1xf32>
    %16 = arith.divf %14, %15 : vector<16x1xf32>
    %17 = vector.broadcast %11 : vector<16x1xf32> to vector<16x32xf32>
    %18 = arith.subf %5, %17 : vector<16x32xf32>
    %19 = arith.mulf %11, %11 : vector<16x1xf32>
    %20 = arith.subf %16, %19 : vector<16x1xf32>
    %cst_13 = arith.constant 9.99999974E-6 : f32
    %21 = vector.broadcast %cst_13 : f32 to vector<16x1xf32>
    %22 = arith.addf %20, %21 : vector<16x1xf32>
    %23 = math.rsqrt %22 : vector<16x1xf32>
    %24 = vector.broadcast %23 : vector<16x1xf32> to vector<16x32xf32>
    %25 = arith.mulf %18, %24 : vector<16x32xf32>
    %26 = vector.broadcast %6 : vector<1x32xf32> to vector<16x32xf32>
    %27 = arith.mulf %25, %26 : vector<16x32xf32>
    %28 = vector.broadcast %7 : vector<1x32xf32> to vector<16x32xf32>
    %29 = arith.addf %27, %28 : vector<16x32xf32>
    %cst_14 = arith.constant 0.000000e+00 : f32
    %30 = vector.broadcast %cst_14 : f32 to vector<16x32xf32>
    %31 = arith.maximumf %29, %30 : vector<16x32xf32>
    %c0_15 = arith.constant 0 : index
    %c0_16 = arith.constant 0 : index
    %c0_17 = arith.constant 0 : index
    %32 = vector.load %arg5[%c0_15, %c0_16, %c0_17] : memref<2x32x192xf32, #tpu.memory_space<vmem>>, vector<1x32x192xf32>
    %33 = vector.shape_cast %32 : vector<1x32x192xf32> to vector<32x192xf32>
    %cst_18 = arith.constant dense<0.000000e+00> : vector<16x192xf32>
    %34 = tpu.matmul %31, %33, %cst_18 {dimension_numbers = #tpu.dot_dimension_numbers<[1], [0], [0], [1], [0, 0, 1, 1], [], []>} : vector<16x32xf32>, vector<32x192xf32>, vector<16x192xf32> -> vector<16x192xf32>
    %c0_19 = arith.constant 0 : index
    %c0_20 = arith.constant 0 : index
    %c0_21 = arith.constant 0 : index
    %35 = vector.load %arg6[%c0_19, %c0_20, %c0_21] : memref<2x1x192xf32, #tpu.memory_space<vmem>>, vector<1x1x192xf32>
    %36 = vector.shape_cast %35 : vector<1x1x192xf32> to vector<1x192xf32>
    %37 = vector.broadcast %36 : vector<1x192xf32> to vector<16x192xf32>
    %38 = arith.addf %34, %37 : vector<16x192xf32>
    %39 = vector.extract_strided_slice %38 {offsets = [0, 0], sizes = [16, 64], strides = [1, 1]} : vector<16x192xf32> to vector<16x64xf32>
    %40 = vector.extract_strided_slice %38 {offsets = [0, 64], sizes = [16, 64], strides = [1, 1]} : vector<16x192xf32> to vector<16x64xf32>
    %41 = vector.extract_strided_slice %38 {offsets = [0, 128], sizes = [16, 64], strides = [1, 1]} : vector<16x192xf32> to vector<16x64xf32>
    %42 = arith.mulf %39, %39 : vector<16x64xf32>
    %43 = vector.shape_cast %42 : vector<16x64xf32> to vector<1x16x64xf32>
    %cst_22 = arith.constant dense<0.000000e+00> : vector<1xf32>
    %44 = vector.multi_reduction <add>, %43, %cst_22 [1, 2] : vector<1x16x64xf32> to vector<1xf32>
    %45 = vector.shape_cast %44 : vector<1xf32> to vector<1x1x1xf32>
    %46 = vector.extract %45[0, 0, 0] : f32 from vector<1x1x1xf32>
    %cst_23 = arith.constant 9.99999996E-13 : f32
    %47 = arith.addf %46, %cst_23 : f32
    %48 = math.rsqrt %47 : f32
    %49 = arith.mulf %40, %40 : vector<16x64xf32>
    %50 = vector.shape_cast %49 : vector<16x64xf32> to vector<1x16x64xf32>
    %cst_24 = arith.constant dense<0.000000e+00> : vector<1xf32>
    %51 = vector.multi_reduction <add>, %50, %cst_24 [1, 2] : vector<1x16x64xf32> to vector<1xf32>
    %52 = vector.shape_cast %51 : vector<1xf32> to vector<1x1x1xf32>
    %53 = vector.extract %52[0, 0, 0] : f32 from vector<1x1x1xf32>
    %cst_25 = arith.constant 9.99999996E-13 : f32
    %54 = arith.addf %53, %cst_25 : f32
    %55 = math.rsqrt %54 : f32
    %56 = arith.mulf %48, %55 : f32
    %cst_26 = arith.constant 0.000000e+00 : f32
    %57 = vector.broadcast %cst_26 : f32 to vector<16x32xf32>
    %58 = vector.extract_strided_slice %39 {offsets = [0, 0], sizes = [16, 32], strides = [1, 1]} : vector<16x64xf32> to vector<16x32xf32>
    %59 = vector.extract_strided_slice %40 {offsets = [0, 0], sizes = [16, 32], strides = [1, 1]} : vector<16x64xf32> to vector<16x32xf32>
    %60 = vector.extract_strided_slice %41 {offsets = [0, 0], sizes = [16, 32], strides = [1, 1]} : vector<16x64xf32> to vector<16x32xf32>
    %cst_27 = arith.constant dense<0.000000e+00> : vector<32x32xf32>
    %61 = tpu.matmul %59, %60, %cst_27 {dimension_numbers = #tpu.dot_dimension_numbers<[0], [0], [1], [1], [0, 1, 1, 1], [], []>} : vector<16x32xf32>, vector<16x32xf32>, vector<32x32xf32> -> vector<32x32xf32>
    %cst_28 = arith.constant dense<0.000000e+00> : vector<32xf32>
    %62 = vector.multi_reduction <add>, %60, %cst_28 [0] : vector<16x32xf32> to vector<32xf32>
    %63 = vector.shape_cast %62 : vector<32xf32> to vector<1x32xf32>
    %cst_29 = arith.constant dense<0.000000e+00> : vector<32xf32>
    %64 = vector.multi_reduction <add>, %59, %cst_29 [0] : vector<16x32xf32> to vector<32xf32>
    %65 = vector.shape_cast %64 : vector<32xf32> to vector<1x32xf32>
    %cst_30 = arith.constant dense<0.000000e+00> : vector<16x32xf32>
    %66 = tpu.matmul %58, %61, %cst_30 {dimension_numbers = #tpu.dot_dimension_numbers<[1], [0], [0], [1], [0, 0, 1, 1], [], []>} : vector<16x32xf32>, vector<32x32xf32>, vector<16x32xf32> -> vector<16x32xf32>
    %67 = vector.broadcast %56 : f32 to vector<16x32xf32>
    %68 = arith.mulf %66, %67 : vector<16x32xf32>
    %69 = vector.broadcast %63 : vector<1x32xf32> to vector<16x32xf32>
    %70 = arith.addf %68, %69 : vector<16x32xf32>
    %71 = vector.broadcast %65 : vector<1x32xf32> to vector<16x32xf32>
    %72 = arith.mulf %58, %71 : vector<16x32xf32>
    %cst_31 = arith.constant dense<0.000000e+00> : vector<16xf32>
    %73 = vector.multi_reduction <add>, %72, %cst_31 [1] : vector<16x32xf32> to vector<16xf32>
    %74 = vector.shape_cast %73 : vector<16xf32> to vector<16x1xf32>
    %75 = vector.broadcast %56 : f32 to vector<16x1xf32>
    %76 = arith.mulf %74, %75 : vector<16x1xf32>
    %cst_32 = arith.constant 1.600000e+01 : f32
    %77 = vector.broadcast %cst_32 : f32 to vector<16x1xf32>
    %78 = arith.addf %76, %77 : vector<16x1xf32>
    %79 = tpu.reciprocal %78 {approx = true} : vector<16x1xf32> -> vector<16x1xf32>
    %80 = vector.broadcast %79 : vector<16x1xf32> to vector<16x32xf32>
    %81 = arith.mulf %70, %80 : vector<16x32xf32>
    %82 = arith.addf %57, %81 : vector<16x32xf32>
    %83 = vector.extract_strided_slice %39 {offsets = [0, 32], sizes = [16, 32], strides = [1, 1]} : vector<16x64xf32> to vector<16x32xf32>
    %84 = vector.extract_strided_slice %40 {offsets = [0, 32], sizes = [16, 32], strides = [1, 1]} : vector<16x64xf32> to vector<16x32xf32>
    %85 = vector.extract_strided_slice %41 {offsets = [0, 32], sizes = [16, 32], strides = [1, 1]} : vector<16x64xf32> to vector<16x32xf32>
    %cst_33 = arith.constant dense<0.000000e+00> : vector<32x32xf32>
    %86 = tpu.matmul %84, %85, %cst_33 {dimension_numbers = #tpu.dot_dimension_numbers<[0], [0], [1], [1], [0, 1, 1, 1], [], []>} : vector<16x32xf32>, vector<16x32xf32>, vector<32x32xf32> -> vector<32x32xf32>
    %cst_34 = arith.constant dense<0.000000e+00> : vector<32xf32>
    %87 = vector.multi_reduction <add>, %85, %cst_34 [0] : vector<16x32xf32> to vector<32xf32>
    %88 = vector.shape_cast %87 : vector<32xf32> to vector<1x32xf32>
    %cst_35 = arith.constant dense<0.000000e+00> : vector<32xf32>
    %89 = vector.multi_reduction <add>, %84, %cst_35 [0] : vector<16x32xf32> to vector<32xf32>
    %90 = vector.shape_cast %89 : vector<32xf32> to vector<1x32xf32>
    %cst_36 = arith.constant dense<0.000000e+00> : vector<16x32xf32>
    %91 = tpu.matmul %83, %86, %cst_36 {dimension_numbers = #tpu.dot_dimension_numbers<[1], [0], [0], [1], [0, 0, 1, 1], [], []>} : vector<16x32xf32>, vector<32x32xf32>, vector<16x32xf32> -> vector<16x32xf32>
    %92 = vector.broadcast %56 : f32 to vector<16x32xf32>
    %93 = arith.mulf %91, %92 : vector<16x32xf32>
    %94 = vector.broadcast %88 : vector<1x32xf32> to vector<16x32xf32>
    %95 = arith.addf %93, %94 : vector<16x32xf32>
    %96 = vector.broadcast %90 : vector<1x32xf32> to vector<16x32xf32>
    %97 = arith.mulf %83, %96 : vector<16x32xf32>
    %cst_37 = arith.constant dense<0.000000e+00> : vector<16xf32>
    %98 = vector.multi_reduction <add>, %97, %cst_37 [1] : vector<16x32xf32> to vector<16xf32>
    %99 = vector.shape_cast %98 : vector<16xf32> to vector<16x1xf32>
    %100 = vector.broadcast %56 : f32 to vector<16x1xf32>
    %101 = arith.mulf %99, %100 : vector<16x1xf32>
    %cst_38 = arith.constant 1.600000e+01 : f32
    %102 = vector.broadcast %cst_38 : f32 to vector<16x1xf32>
    %103 = arith.addf %101, %102 : vector<16x1xf32>
    %104 = tpu.reciprocal %103 {approx = true} : vector<16x1xf32> -> vector<16x1xf32>
    %105 = vector.broadcast %104 : vector<16x1xf32> to vector<16x32xf32>
    %106 = arith.mulf %95, %105 : vector<16x32xf32>
    %107 = arith.addf %82, %106 : vector<16x32xf32>
    %cst_39 = arith.constant 5.000000e-01 : f32
    %108 = vector.broadcast %cst_39 : f32 to vector<16x32xf32>
    %109 = arith.mulf %107, %108 : vector<16x32xf32>
    %cst_40 = arith.constant 5.000000e-01 : f32
    %110 = vector.broadcast %cst_40 : f32 to vector<16x32xf32>
    %111 = arith.mulf %110, %109 : vector<16x32xf32>
    %cst_41 = arith.constant 5.000000e-01 : f32
    %112 = vector.broadcast %cst_41 : f32 to vector<16x32xf32>
    %113 = arith.mulf %112, %31 : vector<16x32xf32>
    %114 = arith.addf %111, %113 : vector<16x32xf32>
    %c0_42 = arith.constant 0 : index
    %c0_43 = arith.constant 0 : index
    %c0_44 = arith.constant 0 : index
    %115 = vector.load %arg7[%c0_42, %c0_43, %c0_44] : memref<2x1x32xf32, #tpu.memory_space<vmem>>, vector<1x1x32xf32>
    %116 = vector.shape_cast %115 : vector<1x1x32xf32> to vector<1x32xf32>
    %c0_45 = arith.constant 0 : index
    %c0_46 = arith.constant 0 : index
    %c0_47 = arith.constant 0 : index
    %117 = vector.load %arg8[%c0_45, %c0_46, %c0_47] : memref<2x1x32xf32, #tpu.memory_space<vmem>>, vector<1x1x32xf32>
    %118 = vector.shape_cast %117 : vector<1x1x32xf32> to vector<1x32xf32>
    %cst_48 = arith.constant dense<0.000000e+00> : vector<16xf32>
    %119 = vector.multi_reduction <add>, %114, %cst_48 [1] : vector<16x32xf32> to vector<16xf32>
    %120 = vector.shape_cast %119 : vector<16xf32> to vector<16x1xf32>
    %cst_49 = arith.constant 3.200000e+01 : f32
    %121 = vector.broadcast %cst_49 : f32 to vector<16x1xf32>
    %122 = arith.divf %120, %121 : vector<16x1xf32>
    %123 = arith.mulf %114, %114 : vector<16x32xf32>
    %cst_50 = arith.constant dense<0.000000e+00> : vector<16xf32>
    %124 = vector.multi_reduction <add>, %123, %cst_50 [1] : vector<16x32xf32> to vector<16xf32>
    %125 = vector.shape_cast %124 : vector<16xf32> to vector<16x1xf32>
    %cst_51 = arith.constant 3.200000e+01 : f32
    %126 = vector.broadcast %cst_51 : f32 to vector<16x1xf32>
    %127 = arith.divf %125, %126 : vector<16x1xf32>
    %128 = vector.broadcast %122 : vector<16x1xf32> to vector<16x32xf32>
    %129 = arith.subf %114, %128 : vector<16x32xf32>
    %130 = arith.mulf %122, %122 : vector<16x1xf32>
    %131 = arith.subf %127, %130 : vector<16x1xf32>
    %cst_52 = arith.constant 9.99999974E-6 : f32
    %132 = vector.broadcast %cst_52 : f32 to vector<16x1xf32>
    %133 = arith.addf %131, %132 : vector<16x1xf32>
    %134 = math.rsqrt %133 : vector<16x1xf32>
    %135 = vector.broadcast %134 : vector<16x1xf32> to vector<16x32xf32>
    %136 = arith.mulf %129, %135 : vector<16x32xf32>
    %137 = vector.broadcast %116 : vector<1x32xf32> to vector<16x32xf32>
    %138 = arith.mulf %136, %137 : vector<16x32xf32>
    %139 = vector.broadcast %118 : vector<1x32xf32> to vector<16x32xf32>
    %140 = arith.addf %138, %139 : vector<16x32xf32>
    %c1 = arith.constant 1 : index
    %c0_53 = arith.constant 0 : index
    %c0_54 = arith.constant 0 : index
    %141 = vector.load %arg5[%c1, %c0_53, %c0_54] : memref<2x32x192xf32, #tpu.memory_space<vmem>>, vector<1x32x192xf32>
    %142 = vector.shape_cast %141 : vector<1x32x192xf32> to vector<32x192xf32>
    %cst_55 = arith.constant dense<0.000000e+00> : vector<16x192xf32>
    %143 = tpu.matmul %140, %142, %cst_55 {dimension_numbers = #tpu.dot_dimension_numbers<[1], [0], [0], [1], [0, 0, 1, 1], [], []>} : vector<16x32xf32>, vector<32x192xf32>, vector<16x192xf32> -> vector<16x192xf32>
    %c1_56 = arith.constant 1 : index
    %c0_57 = arith.constant 0 : index
    %c0_58 = arith.constant 0 : index
    %144 = vector.load %arg6[%c1_56, %c0_57, %c0_58] : memref<2x1x192xf32, #tpu.memory_space<vmem>>, vector<1x1x192xf32>
    %145 = vector.shape_cast %144 : vector<1x1x192xf32> to vector<1x192xf32>
    %146 = vector.broadcast %145 : vector<1x192xf32> to vector<16x192xf32>
    %147 = arith.addf %143, %146 : vector<16x192xf32>
    %148 = vector.extract_strided_slice %147 {offsets = [0, 0], sizes = [16, 64], strides = [1, 1]} : vector<16x192xf32> to vector<16x64xf32>
    %149 = vector.extract_strided_slice %147 {offsets = [0, 64], sizes = [16, 64], strides = [1, 1]} : vector<16x192xf32> to vector<16x64xf32>
    %150 = vector.extract_strided_slice %147 {offsets = [0, 128], sizes = [16, 64], strides = [1, 1]} : vector<16x192xf32> to vector<16x64xf32>
    %151 = arith.mulf %148, %148 : vector<16x64xf32>
    %152 = vector.shape_cast %151 : vector<16x64xf32> to vector<1x16x64xf32>
    %cst_59 = arith.constant dense<0.000000e+00> : vector<1xf32>
    %153 = vector.multi_reduction <add>, %152, %cst_59 [1, 2] : vector<1x16x64xf32> to vector<1xf32>
    %154 = vector.shape_cast %153 : vector<1xf32> to vector<1x1x1xf32>
    %155 = vector.extract %154[0, 0, 0] : f32 from vector<1x1x1xf32>
    %cst_60 = arith.constant 9.99999996E-13 : f32
    %156 = arith.addf %155, %cst_60 : f32
    %157 = math.rsqrt %156 : f32
    %158 = arith.mulf %149, %149 : vector<16x64xf32>
    %159 = vector.shape_cast %158 : vector<16x64xf32> to vector<1x16x64xf32>
    %cst_61 = arith.constant dense<0.000000e+00> : vector<1xf32>
    %160 = vector.multi_reduction <add>, %159, %cst_61 [1, 2] : vector<1x16x64xf32> to vector<1xf32>
    %161 = vector.shape_cast %160 : vector<1xf32> to vector<1x1x1xf32>
    %162 = vector.extract %161[0, 0, 0] : f32 from vector<1x1x1xf32>
    %cst_62 = arith.constant 9.99999996E-13 : f32
    %163 = arith.addf %162, %cst_62 : f32
    %164 = math.rsqrt %163 : f32
    %165 = arith.mulf %157, %164 : f32
    %cst_63 = arith.constant 0.000000e+00 : f32
    %166 = vector.broadcast %cst_63 : f32 to vector<16x32xf32>
    %167 = vector.extract_strided_slice %148 {offsets = [0, 0], sizes = [16, 32], strides = [1, 1]} : vector<16x64xf32> to vector<16x32xf32>
    %168 = vector.extract_strided_slice %149 {offsets = [0, 0], sizes = [16, 32], strides = [1, 1]} : vector<16x64xf32> to vector<16x32xf32>
    %169 = vector.extract_strided_slice %150 {offsets = [0, 0], sizes = [16, 32], strides = [1, 1]} : vector<16x64xf32> to vector<16x32xf32>
    %cst_64 = arith.constant dense<0.000000e+00> : vector<32x32xf32>
    %170 = tpu.matmul %168, %169, %cst_64 {dimension_numbers = #tpu.dot_dimension_numbers<[0], [0], [1], [1], [0, 1, 1, 1], [], []>} : vector<16x32xf32>, vector<16x32xf32>, vector<32x32xf32> -> vector<32x32xf32>
    %cst_65 = arith.constant dense<0.000000e+00> : vector<32xf32>
    %171 = vector.multi_reduction <add>, %169, %cst_65 [0] : vector<16x32xf32> to vector<32xf32>
    %172 = vector.shape_cast %171 : vector<32xf32> to vector<1x32xf32>
    %cst_66 = arith.constant dense<0.000000e+00> : vector<32xf32>
    %173 = vector.multi_reduction <add>, %168, %cst_66 [0] : vector<16x32xf32> to vector<32xf32>
    %174 = vector.shape_cast %173 : vector<32xf32> to vector<1x32xf32>
    %cst_67 = arith.constant dense<0.000000e+00> : vector<16x32xf32>
    %175 = tpu.matmul %167, %170, %cst_67 {dimension_numbers = #tpu.dot_dimension_numbers<[1], [0], [0], [1], [0, 0, 1, 1], [], []>} : vector<16x32xf32>, vector<32x32xf32>, vector<16x32xf32> -> vector<16x32xf32>
    %176 = vector.broadcast %165 : f32 to vector<16x32xf32>
    %177 = arith.mulf %175, %176 : vector<16x32xf32>
    %178 = vector.broadcast %172 : vector<1x32xf32> to vector<16x32xf32>
    %179 = arith.addf %177, %178 : vector<16x32xf32>
    %180 = vector.broadcast %174 : vector<1x32xf32> to vector<16x32xf32>
    %181 = arith.mulf %167, %180 : vector<16x32xf32>
    %cst_68 = arith.constant dense<0.000000e+00> : vector<16xf32>
    %182 = vector.multi_reduction <add>, %181, %cst_68 [1] : vector<16x32xf32> to vector<16xf32>
    %183 = vector.shape_cast %182 : vector<16xf32> to vector<16x1xf32>
    %184 = vector.broadcast %165 : f32 to vector<16x1xf32>
    %185 = arith.mulf %183, %184 : vector<16x1xf32>
    %cst_69 = arith.constant 1.600000e+01 : f32
    %186 = vector.broadcast %cst_69 : f32 to vector<16x1xf32>
    %187 = arith.addf %185, %186 : vector<16x1xf32>
    %188 = tpu.reciprocal %187 {approx = true} : vector<16x1xf32> -> vector<16x1xf32>
    %189 = vector.broadcast %188 : vector<16x1xf32> to vector<16x32xf32>
    %190 = arith.mulf %179, %189 : vector<16x32xf32>
    %191 = arith.addf %166, %190 : vector<16x32xf32>
    %192 = vector.extract_strided_slice %148 {offsets = [0, 32], sizes = [16, 32], strides = [1, 1]} : vector<16x64xf32> to vector<16x32xf32>
    %193 = vector.extract_strided_slice %149 {offsets = [0, 32], sizes = [16, 32], strides = [1, 1]} : vector<16x64xf32> to vector<16x32xf32>
    %194 = vector.extract_strided_slice %150 {offsets = [0, 32], sizes = [16, 32], strides = [1, 1]} : vector<16x64xf32> to vector<16x32xf32>
    %cst_70 = arith.constant dense<0.000000e+00> : vector<32x32xf32>
    %195 = tpu.matmul %193, %194, %cst_70 {dimension_numbers = #tpu.dot_dimension_numbers<[0], [0], [1], [1], [0, 1, 1, 1], [], []>} : vector<16x32xf32>, vector<16x32xf32>, vector<32x32xf32> -> vector<32x32xf32>
    %cst_71 = arith.constant dense<0.000000e+00> : vector<32xf32>
    %196 = vector.multi_reduction <add>, %194, %cst_71 [0] : vector<16x32xf32> to vector<32xf32>
    %197 = vector.shape_cast %196 : vector<32xf32> to vector<1x32xf32>
    %cst_72 = arith.constant dense<0.000000e+00> : vector<32xf32>
    %198 = vector.multi_reduction <add>, %193, %cst_72 [0] : vector<16x32xf32> to vector<32xf32>
    %199 = vector.shape_cast %198 : vector<32xf32> to vector<1x32xf32>
    %cst_73 = arith.constant dense<0.000000e+00> : vector<16x32xf32>
    %200 = tpu.matmul %192, %195, %cst_73 {dimension_numbers = #tpu.dot_dimension_numbers<[1], [0], [0], [1], [0, 0, 1, 1], [], []>} : vector<16x32xf32>, vector<32x32xf32>, vector<16x32xf32> -> vector<16x32xf32>
    %201 = vector.broadcast %165 : f32 to vector<16x32xf32>
    %202 = arith.mulf %200, %201 : vector<16x32xf32>
    %203 = vector.broadcast %197 : vector<1x32xf32> to vector<16x32xf32>
    %204 = arith.addf %202, %203 : vector<16x32xf32>
    %205 = vector.broadcast %199 : vector<1x32xf32> to vector<16x32xf32>
    %206 = arith.mulf %192, %205 : vector<16x32xf32>
    %cst_74 = arith.constant dense<0.000000e+00> : vector<16xf32>
    %207 = vector.multi_reduction <add>, %206, %cst_74 [1] : vector<16x32xf32> to vector<16xf32>
    %208 = vector.shape_cast %207 : vector<16xf32> to vector<16x1xf32>
    %209 = vector.broadcast %165 : f32 to vector<16x1xf32>
    %210 = arith.mulf %208, %209 : vector<16x1xf32>
    %cst_75 = arith.constant 1.600000e+01 : f32
    %211 = vector.broadcast %cst_75 : f32 to vector<16x1xf32>
    %212 = arith.addf %210, %211 : vector<16x1xf32>
    %213 = tpu.reciprocal %212 {approx = true} : vector<16x1xf32> -> vector<16x1xf32>
    %214 = vector.broadcast %213 : vector<16x1xf32> to vector<16x32xf32>
    %215 = arith.mulf %204, %214 : vector<16x32xf32>
    %216 = arith.addf %191, %215 : vector<16x32xf32>
    %cst_76 = arith.constant 5.000000e-01 : f32
    %217 = vector.broadcast %cst_76 : f32 to vector<16x32xf32>
    %218 = arith.mulf %216, %217 : vector<16x32xf32>
    %cst_77 = arith.constant 5.000000e-01 : f32
    %219 = vector.broadcast %cst_77 : f32 to vector<16x32xf32>
    %220 = arith.mulf %219, %218 : vector<16x32xf32>
    %cst_78 = arith.constant 5.000000e-01 : f32
    %221 = vector.broadcast %cst_78 : f32 to vector<16x32xf32>
    %222 = arith.mulf %221, %140 : vector<16x32xf32>
    %223 = arith.addf %220, %222 : vector<16x32xf32>
    %c1_79 = arith.constant 1 : index
    %c0_80 = arith.constant 0 : index
    %c0_81 = arith.constant 0 : index
    %224 = vector.load %arg7[%c1_79, %c0_80, %c0_81] : memref<2x1x32xf32, #tpu.memory_space<vmem>>, vector<1x1x32xf32>
    %225 = vector.shape_cast %224 : vector<1x1x32xf32> to vector<1x32xf32>
    %c1_82 = arith.constant 1 : index
    %c0_83 = arith.constant 0 : index
    %c0_84 = arith.constant 0 : index
    %226 = vector.load %arg8[%c1_82, %c0_83, %c0_84] : memref<2x1x32xf32, #tpu.memory_space<vmem>>, vector<1x1x32xf32>
    %227 = vector.shape_cast %226 : vector<1x1x32xf32> to vector<1x32xf32>
    %cst_85 = arith.constant dense<0.000000e+00> : vector<16xf32>
    %228 = vector.multi_reduction <add>, %223, %cst_85 [1] : vector<16x32xf32> to vector<16xf32>
    %229 = vector.shape_cast %228 : vector<16xf32> to vector<16x1xf32>
    %cst_86 = arith.constant 3.200000e+01 : f32
    %230 = vector.broadcast %cst_86 : f32 to vector<16x1xf32>
    %231 = arith.divf %229, %230 : vector<16x1xf32>
    %232 = arith.mulf %223, %223 : vector<16x32xf32>
    %cst_87 = arith.constant dense<0.000000e+00> : vector<16xf32>
    %233 = vector.multi_reduction <add>, %232, %cst_87 [1] : vector<16x32xf32> to vector<16xf32>
    %234 = vector.shape_cast %233 : vector<16xf32> to vector<16x1xf32>
    %cst_88 = arith.constant 3.200000e+01 : f32
    %235 = vector.broadcast %cst_88 : f32 to vector<16x1xf32>
    %236 = arith.divf %234, %235 : vector<16x1xf32>
    %237 = vector.broadcast %231 : vector<16x1xf32> to vector<16x32xf32>
    %238 = arith.subf %223, %237 : vector<16x32xf32>
    %239 = arith.mulf %231, %231 : vector<16x1xf32>
    %240 = arith.subf %236, %239 : vector<16x1xf32>
    %cst_89 = arith.constant 9.99999974E-6 : f32
    %241 = vector.broadcast %cst_89 : f32 to vector<16x1xf32>
    %242 = arith.addf %240, %241 : vector<16x1xf32>
    %243 = math.rsqrt %242 : vector<16x1xf32>
    %244 = vector.broadcast %243 : vector<16x1xf32> to vector<16x32xf32>
    %245 = arith.mulf %238, %244 : vector<16x32xf32>
    %246 = vector.broadcast %225 : vector<1x32xf32> to vector<16x32xf32>
    %247 = arith.mulf %245, %246 : vector<16x32xf32>
    %248 = vector.broadcast %227 : vector<1x32xf32> to vector<16x32xf32>
    %249 = arith.addf %247, %248 : vector<16x32xf32>
    %c0_90 = arith.constant 0 : index
    %c0_91 = arith.constant 0 : index
    %250 = vector.load %arg9[%c0_90, %c0_91] : memref<32x128xf32, #tpu.memory_space<vmem>>, vector<32x128xf32>
    %cst_92 = arith.constant dense<0.000000e+00> : vector<16x128xf32>
    %251 = tpu.matmul %249, %250, %cst_92 {dimension_numbers = #tpu.dot_dimension_numbers<[1], [0], [0], [1], [0, 0, 1, 1], [], []>} : vector<16x32xf32>, vector<32x128xf32>, vector<16x128xf32> -> vector<16x128xf32>
    %c0_93 = arith.constant 0 : index
    %c0_94 = arith.constant 0 : index
    %252 = vector.load %arg10[%c0_93, %c0_94] : memref<1x128xf32, #tpu.memory_space<vmem>>, vector<1x128xf32>
    %253 = vector.broadcast %252 : vector<1x128xf32> to vector<16x128xf32>
    %254 = arith.addf %251, %253 : vector<16x128xf32>
    %c0_95 = arith.constant 0 : index
    %c0_96 = arith.constant 0 : index
    %255 = vector.load %arg11[%c0_95, %c0_96] : memref<16x128xf32, #tpu.memory_space<vmem>>, vector<16x128xf32>
    tpu.vector_store %arg11[%c0_95, %c0_96], %254 {strides = array<i32>} : memref<16x128xf32, #tpu.memory_space<vmem>>, vector<16x128xf32>,
    return
  }
}

</mosaic_0001>

<llo_original>
// kernel: tpu_custom_call.1
$region0: #{tpu_custom_call.1}
  #allocation0 [shape = 'u32[]', space=smem, size = 0x4, offset = 0x4, fixed_abs, tag = 'smem constant byte address 0x4 - core index']
  #allocation1 [shape = 'u32[144,128]{1,0:T(1,128)}', space=vmem, size = 0x12000, scoped, tag = 'internal scratch']
  %s0 = inlined_call_operand.hbm [shape: f32[16,16], index: 0, kind: input, shape index: {}]
  %s1 = inlined_call_operand.hbm [shape: f32[16,32], index: 1, kind: input, shape index: {}]
  %s2 = inlined_call_operand.hbm [shape: f32[1,32], index: 2, kind: input, shape index: {}]
  %s3 = inlined_call_operand.hbm [shape: f32[1,32], index: 3, kind: input, shape index: {}]
  %s4 = inlined_call_operand.hbm [shape: f32[1,32], index: 4, kind: input, shape index: {}]
  %s5 = inlined_call_operand.hbm [shape: f32[2,32,192], index: 5, kind: input, shape index: {}]
  %s6 = inlined_call_operand.hbm [shape: f32[2,1,192], index: 6, kind: input, shape index: {}]
  %s7 = inlined_call_operand.vmem [shape: f32[2,1,32], index: 7, kind: input, shape index: {}]
  %s8 = inlined_call_operand.hbm [shape: f32[2,1,32], index: 8, kind: input, shape index: {}]
  %s9 = inlined_call_operand.vmem [shape: f32[32,128], index: 9, kind: input, shape index: {}]
  %s10 = inlined_call_operand.vmem [shape: f32[1,128], index: 10, kind: input, shape index: {}]
  %s11 = inlined_call_operand.hbm [shape: f32[16,128], index: 11, kind: output, shape index: {}]
  %s12 = sld [smem:[#allocation0]]
  $region86: #{tpu_custom_call.1} parent=0
    _
  %s14 = ssub.s32 1, %s12
  %s15 = scalar_select 0, %s14, %s12
  $region1: #{tpu_custom_call.1} parent=0
    #allocation2 [shape = 'u8[8192]{0}', space=vmem, size = 0x2000, scoped, tag = 'input window, operand 0, single buffered']
    #allocation3 [shape = 's32[1]{0}', space=sflag, size = 0x4, scoped, tag = 'scoped memory for tpu_custom_call.1']
    #allocation4 [shape = 's32[1]{0}', space=sflag, size = 0x4, scoped, tag = 'scoped memory for tpu_custom_call.1']
    #allocation5 [shape = 'u8[8192]{0}', space=vmem, size = 0x2000, scoped, tag = 'input window, operand 1, single buffered']
    #allocation6 [shape = 's32[1]{0}', space=sflag, size = 0x4, scoped, tag = 'scoped memory for tpu_custom_call.1']
    #allocation7 [shape = 'u8[512]{0}', space=vmem, size = 0x400, scoped, tag = 'input window, operand 2, single buffered']
    #allocation8 [shape = 'u8[512]{0}', space=vmem, size = 0x400, scoped, tag = 'input window, operand 3, single buffered']
    #allocation9 [shape = 's32[1]{0}', space=sflag, size = 0x4, scoped, tag = 'scoped memory for tpu_custom_call.1']
    #allocation10 [shape = 'u8[512]{0}', space=vmem, size = 0x400, scoped, tag = 'input window, operand 4, single buffered']
    #allocation11 [shape = 'u8[65536]{0}', space=vmem, size = 0x10000, scoped, tag = 'input window, operand 5, single buffered']
    #allocation12 [shape = 's32[1]{0}', space=sflag, size = 0x4, scoped, tag = 'scoped memory for tpu_custom_call.1']
    #allocation13 [shape = 'u8[2048]{0}', space=vmem, size = 0x800, scoped, tag = 'input window, operand 6, single buffered']
    #allocation14 [shape = 'u8[1024]{0}', space=vmem, size = 0x400, scoped, tag = 'input window, operand 8, single buffered']
    #allocation15 [shape = 's32[1]{0}', space=sflag, size = 0x4, scoped, tag = 'scoped memory for tpu_custom_call.1']
    #allocation16 [shape = 'u8[8192]{0}', space=vmem, size = 0x2000, scoped, tag = 'output window, operand 0, single buffered']
    %16 = vsyncpa [#allocation3], 0
    %17 = vsyncpa [#allocation6], 0
    %18 = vsyncpa [#allocation9], 0
    %19 = vsyncpa [#allocation12], 0
    %20 = vsyncpa [#allocation15], 0
    %21 = vsyncpa [#allocation4], 0
    // Predicated region
    $region2: #{tpu_custom_call.1} parent=1 // pred_check
      _
    $region3: #{tpu_custom_call.1} parent=1 // pred_check_branch
      %23 = sbr.rel (0) target = $region5
    $region4: #{tpu_custom_call.1} parent=1 // pred_region
      %s25 = ssub.s32 256, 256
      %26 = vsyncadd [#allocation3], %s25
      %s27 = sshll.u32 [#allocation2], 4
      %s28 = int_to_ptr.vmem [resolvable:$true] %s27
      %33 = dma.hbm_to_vmem [thread:$0]  %s0, 256, %s28, [#allocation3], 128, 128, 8
    $region5: #{tpu_custom_call.1} parent=1 // pred_fallthru
      _
    // Predicated region
    $region6: #{tpu_custom_call.1} parent=1 // pred_check
      _
    $region7: #{tpu_custom_call.1} parent=1 // pred_check_branch
      %35 = sbr.rel (0) target = $region9
    $region8: #{tpu_custom_call.1} parent=1 // pred_region
      %s37 = ssub.s32 256, 256
      %38 = vsyncadd [#allocation6], %s37
      %s39 = sshll.u32 [#allocation5], 4
      %s40 = int_to_ptr.vmem [resolvable:$true] %s39
      %45 = dma.hbm_to_vmem [thread:$0]  %s1, 256, %s40, [#allocation6], 128, 128, 8
    $region9: #{tpu_custom_call.1} parent=1 // pred_fallthru
      _
    // Predicated region
    $region10: #{tpu_custom_call.1} parent=1 // pred_check
      _
    $region11: #{tpu_custom_call.1} parent=1 // pred_check_branch
      %47 = sbr.rel (0) target = $region13
    $region12: #{tpu_custom_call.1} parent=1 // pred_region
      %s49 = ssub.s32 16, 16
      %50 = vsyncadd [#allocation6], %s49
      %s52 = sshll.u32 [#allocation7], 4
      %s53 = int_to_ptr.vmem [resolvable:$true] %s52
      %55 = dma.hbm_to_vmem [thread:$0]  %s2, 16, %s53, [#allocation6]
    $region13: #{tpu_custom_call.1} parent=1 // pred_fallthru
      _
    // Predicated region
    $region14: #{tpu_custom_call.1} parent=1 // pred_check
      _
    $region15: #{tpu_custom_call.1} parent=1 // pred_check_branch
      %57 = sbr.rel (0) target = $region17
    $region16: #{tpu_custom_call.1} parent=1 // pred_region
      %s59 = ssub.s32 16, 16
      %60 = vsyncadd [#allocation9], %s59
      %s62 = sshll.u32 [#allocation8], 4
      %s63 = int_to_ptr.vmem [resolvable:$true] %s62
      %65 = dma.hbm_to_vmem [thread:$0]  %s3, 16, %s63, [#allocation9]
    $region17: #{tpu_custom_call.1} parent=1 // pred_fallthru
      _
    // Predicated region
    $region18: #{tpu_custom_call.1} parent=1 // pred_check
      _
    $region19: #{tpu_custom_call.1} parent=1 // pred_check_branch
      %67 = sbr.rel (0) target = $region21
    $region20: #{tpu_custom_call.1} parent=1 // pred_region
      %s69 = ssub.s32 16, 16
      %70 = vsyncadd [#allocation9], %s69
      %s72 = sshll.u32 [#allocation10], 4
      %s73 = int_to_ptr.vmem [resolvable:$true] %s72
      %75 = dma.hbm_to_vmem [thread:$0]  %s4, 16, %s73, [#allocation9]
    $region21: #{tpu_custom_call.1} parent=1 // pred_fallthru
      _
    // Predicated region
    $region22: #{tpu_custom_call.1} parent=1 // pred_check
      _
    $region23: #{tpu_custom_call.1} parent=1 // pred_check_branch
      %77 = sbr.rel (0) target = $region25
    $region24: #{tpu_custom_call.1} parent=1 // pred_region
      %s79 = ssub.s32 2048, 2048
      %80 = vsyncadd [#allocation12], %s79
      %s81 = sshll.u32 [#allocation11], 4
      %s82 = int_to_ptr.vmem [resolvable:$true] %s81
      %87 = dma.hbm_to_vmem [thread:$0]  %s5, 2048, %s82, [#allocation12], 256, 256, 16
    $region25: #{tpu_custom_call.1} parent=1 // pred_fallthru
      _
    // Predicated region
    $region26: #{tpu_custom_call.1} parent=1 // pred_check
      _
    $region27: #{tpu_custom_call.1} parent=1 // pred_check_branch
      %89 = sbr.rel (0) target = $region29
    $region28: #{tpu_custom_call.1} parent=1 // pred_region
      %s91 = ssub.s32 64, 64
      %92 = vsyncadd [#allocation12], %s91
      %s93 = sshll.u32 [#allocation13], 4
      %s94 = int_to_ptr.vmem [resolvable:$true] %s93
      %99 = dma.hbm_to_vmem [thread:$0]  %s6, 64, %s94, [#allocation12], 32, 32, 2
    $region29: #{tpu_custom_call.1} parent=1 // pred_fallthru
      _
    // Predicated region
    $region30: #{tpu_custom_call.1} parent=1 // pred_check
      _
    $region31: #{tpu_custom_call.1} parent=1 // pred_check_branch
      %101 = sbr.rel (0) target = $region33
    $region32: #{tpu_custom_call.1} parent=1 // pred_region
      _
    $region33: #{tpu_custom_call.1} parent=1 // pred_fallthru
      _
    // Predicated region
    $region34: #{tpu_custom_call.1} parent=1 // pred_check
      _
    $region35: #{tpu_custom_call.1} parent=1 // pred_check_branch
      %103 = sbr.rel (0) target = $region37
    $region36: #{tpu_custom_call.1} parent=1 // pred_region
      %s105 = ssub.s32 32, 32
      %106 = vsyncadd [#allocation15], %s105
      %s107 = sshll.u32 [#allocation14], 4
      %s108 = int_to_ptr.vmem [resolvable:$true] %s107
      %113 = dma.hbm_to_vmem [thread:$0]  %s8, 32, %s108, [#allocation15], 16, 16, 1
    $region37: #{tpu_custom_call.1} parent=1 // pred_fallthru
      _
    // Predicated region
    $region38: #{tpu_custom_call.1} parent=1 // pred_check
      _
    $region39: #{tpu_custom_call.1} parent=1 // pred_check_branch
      %115 = sbr.rel (0) target = $region41
    $region40: #{tpu_custom_call.1} parent=1 // pred_region
      _
    $region41: #{tpu_custom_call.1} parent=1 // pred_fallthru
      _
    // Predicated region
    $region42: #{tpu_custom_call.1} parent=1 // pred_check
      _
    $region43: #{tpu_custom_call.1} parent=1 // pred_check_branch
      %117 = sbr.rel (0) target = $region45
    $region44: #{tpu_custom_call.1} parent=1 // pred_region
      _
    $region45: #{tpu_custom_call.1} parent=1 // pred_fallthru
      _
    // Predicated region
    $region46: #{tpu_custom_call.1} parent=1 // pred_check
      _
    $region47: #{tpu_custom_call.1} parent=1 // pred_check_branch
      %119 = sbr.rel (0) target = $region49
    $region48: #{tpu_custom_call.1} parent=1 // pred_region
      %120 = dma.done [#allocation3], 256
    $region49: #{tpu_custom_call.1} parent=1 // pred_fallthru
      _
    // Predicated region
    $region50: #{tpu_custom_call.1} parent=1 // pred_check
      _
    $region51: #{tpu_custom_call.1} parent=1 // pred_check_branch
      %122 = sbr.rel (0) target = $region53
    $region52: #{tpu_custom_call.1} parent=1 // pred_region
      %123 = dma.done [#allocation6], 256
    $region53: #{tpu_custom_call.1} parent=1 // pred_fallthru
      _
    // Predicated region
    $region54: #{tpu_custom_call.1} parent=1 // pred_check
      _
    $region55: #{tpu_custom_call.1} parent=1 // pred_check_branch
      %125 = sbr.rel (0) target = $region57
    $region56: #{tpu_custom_call.1} parent=1 // pred_region
      %126 = dma.done [#allocation6], 16
    $region57: #{tpu_custom_call.1} parent=1 // pred_fallthru
      _
    // Predicated region
    $region58: #{tpu_custom_call.1} parent=1 // pred_check
      _
    $region59: #{tpu_custom_call.1} parent=1 // pred_check_branch
      %128 = sbr.rel (0) target = $region61
    $region60: #{tpu_custom_call.1} parent=1 // pred_region
      %129 = dma.done [#allocation9], 16
    $region61: #{tpu_custom_call.1} parent=1 // pred_fallthru
      _
    // Predicated region
    $region62: #{tpu_custom_call.1} parent=1 // pred_check
      _
    $region63: #{tpu_custom_call.1} parent=1 // pred_check_branch
      %131 = sbr.rel (0) target = $region65
    $region64: #{tpu_custom_call.1} parent=1 // pred_region
      %132 = dma.done [#allocation9], 16
    $region65: #{tpu_custom_call.1} parent=1 // pred_fallthru
      _
    // Predicated region
    $region66: #{tpu_custom_call.1} parent=1 // pred_check
      _
    $region67: #{tpu_custom_call.1} parent=1 // pred_check_branch
      %134 = sbr.rel (0) target = $region69
    $region68: #{tpu_custom_call.1} parent=1 // pred_region
      %135 = dma.done [#allocation12], 2048
    $region69: #{tpu_custom_call.1} parent=1 // pred_fallthru
      _
    // Predicated region
    $region70: #{tpu_custom_call.1} parent=1 // pred_check
      _
    $region71: #{tpu_custom_call.1} parent=1 // pred_check_branch
      %137 = sbr.rel (0) target = $region73
    $region72: #{tpu_custom_call.1} parent=1 // pred_region
      %138 = dma.done [#allocation12], 64
    $region73: #{tpu_custom_call.1} parent=1 // pred_fallthru
      _
    // Predicated region
    $region74: #{tpu_custom_call.1} parent=1 // pred_check
      _
    $region75: #{tpu_custom_call.1} parent=1 // pred_check_branch
      %140 = sbr.rel (0) target = $region77
    $region76: #{tpu_custom_call.1} parent=1 // pred_region
      %141 = dma.done [#allocation15], 32
    $region77: #{tpu_custom_call.1} parent=1 // pred_fallthru
      _
    %v142 = vld [vmem:[#allocation2] sm:$0xff]
    %v143 = vld [vmem:[#allocation2 + $0x8] sm:$0xff]
    %v144 = vld [vmem:[#allocation5] sm:$0xff]
    %v145 = vld [vmem:[#allocation5 + $0x8] sm:$0xff]
    %v146 = vld [vmem:[#allocation7] sm:$0x1]
    %v148 = vlaneseq
    %v149 = vshrl.u32 %v148, 7
    %v150 = vsub.s32 0, %v149
    %v151 = vrot.slane %v146, %v150
    %vm153 = vcmask 130048
    %v155 = vsel %vm153, %v142, 0
    %v158 = vsel %vm153, %v143, 0
    %160 = vmatprep.subr.mxu0 0.0
    %161 = vmatpush1.msra.mxu0 %v144
    %162 = vmatprep.subr.mxu0 0.0
    %163 = vmatpush1.msra.mxu0 %v145
    %164 = vmatprep.subr.mxu0 0.0
    %165 = vmatpush1.msra.mxu0 0.0
    %166 = vmatprep.subr.mxu0 0.0
    %167 = vmatpush1.msra.mxu0 0.0
    %168 = vmatprep.subr.mxu0 0.0
    %169 = vmatpush1.msra.mxu0 0.0
    %170 = vmatprep.subr.mxu0 0.0
    %171 = vmatpush1.msra.mxu0 0.0
    %172 = vmatprep.subr.mxu0 0.0
    %173 = vmatpush1.msra.mxu0 0.0
    %174 = vmatprep.subr.mxu0 0.0
    %175 = vmatpush1.msra.mxu0 0.0
    %176 = vmatprep.subr.mxu0 0.0
    %177 = vmatpush1.msra.mxu0 0.0
    %178 = vmatprep.subr.mxu0 0.0
    %179 = vmatpush1.msra.mxu0 0.0
    %180 = vmatprep.subr.mxu0 0.0
    %181 = vmatpush1.msra.mxu0 0.0
    %182 = vmatprep.subr.mxu0 0.0
    %183 = vmatpush1.msra.mxu0 0.0
    %184 = vmatprep.subr.mxu0 0.0
    %185 = vmatpush1.msra.mxu0 0.0
    %186 = vmatprep.subr.mxu0 0.0
    %187 = vmatpush1.msra.mxu0 0.0
    %188 = vmatprep.subr.mxu0 0.0
    %189 = vmatpush1.msra.mxu0 0.0
    %190 = vmatprep.subr.mxu0 0.0
    %191 = vmatpush1.msra.mxu0 0.0
    %192 = vmatprep.subr.mxu0 0.0
    %193 = vmatpush1.msra.mxu0 0.0
    %194 = vmatprep.subr.mxu0 0.0
    %195 = vmatpush1.msra.mxu0 0.0
    %196 = vmatprep.subr.mxu0 0.0
    %197 = vmatpush1.msra.mxu0 0.0
    %198 = vmatprep.subr.mxu0 0.0
    %199 = vmatpush1.msra.mxu0 0.0
    %200 = vmatprep.subr.mxu0 0.0
    %201 = vmatpush1.msra.mxu0 0.0
    %202 = vmatprep.subr.mxu0 0.0
    %203 = vmatpush1.msra.mxu0 0.0
    %204 = vmatprep.subr.mxu0 0.0
    %205 = vmatpush1.msra.mxu0 0.0
    %206 = vmatprep.subr.mxu0 0.0
    %207 = vmatpush1.msra.mxu0 0.0
    %208 = vmatprep.subr.mxu0 0.0
    %209 = vmatpush1.msra.mxu0 0.0
    %210 = vmatprep.subr.mxu0 0.0
    %211 = vmatpush1.msra.mxu0 0.0
    %212 = vmatprep.subr.mxu0 0.0
    %213 = vmatpush1.msra.mxu0 0.0
    %214 = vmatprep.subr.mxu0 0.0
    %215 = vmatpush1.msra.mxu0 0.0
    %216 = vmatprep.subr.mxu0 0.0
    %217 = vmatpush1.msra.mxu0 0.0
    %218 = vmatprep.subr.mxu0 0.0
    %219 = vmatpush1.msra.mxu0 0.0
    %220 = vmatprep.subr.mxu0 0.0
    %221 = vmatpush1.msra.mxu0 0.0
    %222 = vmatprep.subr.mxu0 0.0
    %223 = vmatpush1.msra.mxu0 0.0
    %224 = vmatprep.mubr.f32.mxu0 0.0
    %225 = vmatmul.mubr.f32.gmra.mrb[0].mxu0 %v155
    %v226 = vpop.f32.mrb[0].mxu0
    %v227 = vadd.f32 %v151, %v226
    %v228 = vpop.f32.mrb[0].mxu0
    %229 = vmatprep.mubr.f32.mxu0 0.0
    %230 = vmatmul.mubr.f32.gmra.mrb[0].mxu0 %v158
    %v231 = vpop.f32.mrb[0].mxu0
    %v232 = vadd.f32 %v151, %v231
    %v233 = vpop.f32.mrb[0].mxu0
    %234 = vdwg.mxu0
    %v235 = vld [vmem:[#allocation8] sm:$0x1]
    %v236 = vld [vmem:[#allocation10] sm:$0x1]
    %vm237 = vcmask 261120
    %v238 = vsel %vm237, %v227, 0.0
    %239 = vadd.xlane.f32.xlu0 %v238
    %v240 = vpop.xlane.xlu0 %239
    %v241 = vsel %vm237, %v232, 0.0
    %242 = vadd.xlane.f32.xlu0 %v241
    %v243 = vpop.xlane.xlu0 %242
    %v244 = vrcp.pop 32.0
    %v245 = vmul.f32 %v240, %v244
    %v246 = vmul.f32 %v243, %v244
    %v247 = vmul.f32 %v227, %v227
    %v248 = vmul.f32 %v232, %v232
    %v249 = vsel %vm237, %v247, 0.0
    %250 = vadd.xlane.f32.xlu0 %v249
    %v251 = vpop.xlane.xlu0 %250
    %v252 = vsel %vm237, %v248, 0.0
    %253 = vadd.xlane.f32.xlu0 %v252
    %v254 = vpop.xlane.xlu0 %253
    %v255 = vmul.f32 %v251, %v244
    %v256 = vmul.f32 %v254, %v244
    %v257 = vsub.f32 %v227, %v245
    %v258 = vsub.f32 %v232, %v246
    %v259 = vmul.f32 %v245, %v245
    %v260 = vmul.f32 %v246, %v246
    %v261 = vsub.f32 %v255, %v259
    %v262 = vsub.f32 %v256, %v260
    %v263 = vadd.f32 %v261, 1e-05
    %v264 = vadd.f32 %v262, 1e-05
    %v265 = vrsqrt.pop %v263
    %v266 = vrsqrt.pop %v264
    %v267 = vmul.f32 %v257, %v265
    %v268 = vmul.f32 %v258, %v266
    %v270 = vlaneseq
    %v271 = vshrl.u32 %v270, 7
    %v272 = vsub.s32 0, %v271
    %v273 = vrot.slane %v235, %v272
    %v275 = vmul.f32 %v267, %v273
    %v276 = vmul.f32 %v268, %v273
    %v278 = vlaneseq
    %v279 = vshrl.u32 %v278, 7
    %v280 = vsub.s32 0, %v279
    %v281 = vrot.slane %v236, %v280
    %v283 = vadd.f32 %v275, %v281
    %v284 = vadd.f32 %v276, %v281
    %v285 = vmax.f32 %v283, 0.0
    %v286 = vmax.f32 %v284, 0.0
    %v287 = vld [vmem:[#allocation11] sm:$0xff]
    %v288 = vld [vmem:[#allocation11 + $0x8] sm:$0xff]
    %v289 = vld [vmem:[#allocation11 + $0x10] sm:$0xff]
    %v290 = vld [vmem:[#allocation11 + $0x18] sm:$0xff]
    %v291 = vld [vmem:[#allocation11 + $0x20] sm:$0xff]
    %v292 = vld [vmem:[#allocation11 + $0x28] sm:$0xff]
    %v293 = vld [vmem:[#allocation11 + $0x30] sm:$0xff]
    %v294 = vld [vmem:[#allocation11 + $0x38] sm:$0xff]
    %v295 = vld [vmem:[#allocation13] sm:$0x3]
    %v297 = vlaneseq
    %v298 = vshrl.u32 %v297, 7
    %v299 = vsub.s32 0, %v298
    %v300 = vrot.slane %v295, %v299
    %v301 = vlaneseq
    %v302 = vshrl.u32 %v301, 7
    %v303 = vsub.s32 1, %v302
    %v304 = vrot.slane %v295, %v303
    %v308 = vsel %vm237, %v285, 0
    %v311 = vsel %vm237, %v286, 0
    %313 = vmatprep.subr.mxu0 %v288
    %314 = vmatpush1.msra.mxu0 %v287
    %315 = vmatprep.subr.mxu0 %v290
    %316 = vmatpush1.msra.mxu0 %v289
    %317 = vmatprep.subr.mxu0 %v292
    %318 = vmatpush1.msra.mxu0 %v291
    %319 = vmatprep.subr.mxu0 %v294
    %320 = vmatpush1.msra.mxu0 %v293
    %321 = vmatprep.subr.mxu0 0.0
    %322 = vmatpush1.msra.mxu0 0.0
    %323 = vmatprep.subr.mxu0 0.0
    %324 = vmatpush1.msra.mxu0 0.0
    %325 = vmatprep.subr.mxu0 0.0
    %326 = vmatpush1.msra.mxu0 0.0
    %327 = vmatprep.subr.mxu0 0.0
    %328 = vmatpush1.msra.mxu0 0.0
    %329 = vmatprep.subr.mxu0 0.0
    %330 = vmatpush1.msra.mxu0 0.0
    %331 = vmatprep.subr.mxu0 0.0
    %332 = vmatpush1.msra.mxu0 0.0
    %333 = vmatprep.subr.mxu0 0.0
    %334 = vmatpush1.msra.mxu0 0.0
    %335 = vmatprep.subr.mxu0 0.0
    %336 = vmatpush1.msra.mxu0 0.0
    %337 = vmatprep.subr.mxu0 0.0
    %338 = vmatpush1.msra.mxu0 0.0
    %339 = vmatprep.subr.mxu0 0.0
    %340 = vmatpush1.msra.mxu0 0.0
    %341 = vmatprep.subr.mxu0 0.0
    %342 = vmatpush1.msra.mxu0 0.0
    %343 = vmatprep.subr.mxu0 0.0
    %344 = vmatpush1.msra.mxu0 0.0
    %345 = vmatprep.subr.mxu0 0.0
    %346 = vmatpush1.msra.mxu0 0.0
    %347 = vmatprep.subr.mxu0 0.0
    %348 = vmatpush1.msra.mxu0 0.0
    %349 = vmatprep.subr.mxu0 0.0
    %350 = vmatpush1.msra.mxu0 0.0
    %351 = vmatprep.subr.mxu0 0.0
    %352 = vmatpush1.msra.mxu0 0.0
    %353 = vmatprep.subr.mxu0 0.0
    %354 = vmatpush1.msra.mxu0 0.0
    %355 = vmatprep.subr.mxu0 0.0
    %356 = vmatpush1.msra.mxu0 0.0
    %357 = vmatprep.subr.mxu0 0.0
    %358 = vmatpush1.msra.mxu0 0.0
    %359 = vmatprep.subr.mxu0 0.0
    %360 = vmatpush1.msra.mxu0 0.0
    %361 = vmatprep.subr.mxu0 0.0
    %362 = vmatpush1.msra.mxu0 0.0
    %363 = vmatprep.subr.mxu0 0.0
    %364 = vmatpush1.msra.mxu0 0.0
    %365 = vmatprep.subr.mxu0 0.0
    %366 = vmatpush1.msra.mxu0 0.0
    %367 = vmatprep.subr.mxu0 0.0
    %368 = vmatpush1.msra.mxu0 0.0
    %369 = vmatprep.subr.mxu0 0.0
    %370 = vmatpush1.msra.mxu0 0.0
    %371 = vmatprep.subr.mxu0 0.0
    %372 = vmatpush1.msra.mxu0 0.0
    %373 = vmatprep.subr.mxu0 0.0
    %374 = vmatpush1.msra.mxu0 0.0
    %375 = vmatprep.subr.mxu0 0.0
    %376 = vmatpush1.msra.mxu0 0.0
    %377 = vmatprep.mubr.f32.mxu0 0.0
    %378 = vmatmul.mubr.f32.gmra.mrb[0].mxu0 %v308
    %v379 = vpop.f32.mrb[0].mxu0
    %v380 = vadd.f32 %v300, %v379
    %v381 = vpop.f32.mrb[0].mxu0
    %v382 = vadd.f32 %v304, %v381
    %383 = vmatprep.mubr.f32.mxu0 0.0
    %384 = vmatmul.mubr.f32.gmra.mrb[0].mxu0 %v311
    %v385 = vpop.f32.mrb[0].mxu0
    %v386 = vadd.f32 %v300, %v385
    %v387 = vpop.f32.mrb[0].mxu0
    %v388 = vadd.f32 %v304, %v387
    %389 = vdwg.mxu0
    %v390 = vmul.f32 %v380, %v380
    %v391 = vmul.f32 %v386, %v386
    %vm392 = vcmask 523264
    %v393 = vsel %vm392, %v390, 0.0
    %v394 = vsel %vm392, %v391, 0.0
    %v395 = vadd.f32 %v393, %v394
    %396 = vadd.xlane.f32.xlu0 %v395
    %v397 = vpop.xlane.xlu0 %396
    %v398 = vrot.slane %v397, 4
    %v399 = vadd.f32 %v397, %v398
    %v400 = vrot.slane %v399, 2
    %v401 = vadd.f32 %v399, %v400
    %v402 = vrot.slane %v401, 1
    %v403 = vadd.f32 %v401, %v402
    %s404 = vtos %v403
    %s405 = sadd.f32 %s404, 1e-12
    %v406 = vstv %s405
    %v407 = vrsqrt.pop %v406
    %s408 = vtos %v407
    %411 = vrot.lane.b32.xlu0 %v390, 64
    %v412 = vpop.permute.xlu0 %411
    %413 = vrot.lane.b32.xlu0 %v391, 64
    %v414 = vpop.permute.xlu0 %413
    %v417 = vsel %vm392, %v412, 0.0
    %v418 = vsel %vm392, %v414, 0.0
    %v419 = vadd.f32 %v417, %v418
    %420 = vadd.xlane.f32.xlu0 %v419
    %v421 = vpop.xlane.xlu0 %420
    %v422 = vrot.slane %v421, 4
    %v423 = vadd.f32 %v421, %v422
    %v424 = vrot.slane %v423, 2
    %v425 = vadd.f32 %v423, %v424
    %v426 = vrot.slane %v425, 1
    %v427 = vadd.f32 %v425, %v426
    %s428 = vtos %v427
    %s429 = sadd.f32 %s428, 1e-12
    %v430 = vstv %s429
    %v431 = vrsqrt.pop %v430
    %s432 = vtos %v431
    %s433 = smul.f32 %s408, %s432
    %436 = vrot.lane.b32.xlu0 %v380, 64
    %v437 = vpop.permute.xlu0 %436
    %438 = vrot.lane.b32.xlu0 %v386, 64
    %v439 = vpop.permute.xlu0 %438
    %442 = vxpose.xlu0.b32.start [1/16] %v437, 128
    %443 = vxpose.xlu0.b32.cont [2/16] %v439, 128
    %444 = vxpose.xlu0.b32.cont [3/16] 0.0, 128
    %445 = vxpose.xlu0.b32.cont [4/16] 0.0, 128
    %446 = vxpose.xlu0.b32.cont [5/16] 0.0, 128
    %447 = vxpose.xlu0.b32.cont [6/16] 0.0, 128
    %448 = vxpose.xlu0.b32.cont [7/16] 0.0, 128
    %449 = vxpose.xlu0.b32.cont [8/16] 0.0, 128
    %450 = vxpose.xlu0.b32.cont [9/16] 0.0, 128
    %451 = vxpose.xlu0.b32.cont [10/16] 0.0, 128
    %452 = vxpose.xlu0.b32.cont [11/16] 0.0, 128
    %453 = vxpose.xlu0.b32.cont [12/16] 0.0, 128
    %454 = vxpose.xlu0.b32.cont [13/16] 0.0, 128
    %455 = vxpose.xlu0.b32.cont [14/16] 0.0, 128
    %456 = vxpose.xlu0.b32.cont [15/16] 0.0, 128
    %457 = vxpose.xlu0.b32.end [16/16] 0.0, 128
    %v458 = vpop.trf.xlu0
    %v459 = vpop.trf.xlu0
    %v460 = vpop.trf.xlu0
    %v461 = vpop.trf.xlu0
    %v462 = vpop.trf.xlu0
    %v463 = vpop.trf.xlu0
    %v464 = vpop.trf.xlu0
    %v465 = vpop.trf.xlu0
    %v466 = vpop.trf.xlu0
    %v467 = vpop.trf.xlu0
    %v468 = vpop.trf.xlu0
    %v469 = vpop.trf.xlu0
    %v470 = vpop.trf.xlu0
    %v471 = vpop.trf.xlu0
    %v472 = vpop.trf.xlu0
    %v473 = vpop.trf.xlu0
    %v475 = vsel %vm153, %v458, 0
    %v478 = vsel %vm153, %v459, 0
    %v481 = vsel %vm153, %v460, 0
    %v484 = vsel %vm153, %v461, 0
    %486 = vmatprep.subr.mxu0 0.0
    %487 = vmatpush1.msra.mxu0 %v382
    %488 = vmatprep.subr.mxu0 0.0
    %489 = vmatpush1.msra.mxu0 %v388
    %490 = vmatprep.subr.mxu0 0.0
    %491 = vmatpush1.msra.mxu0 0.0
    %492 = vmatprep.subr.mxu0 0.0
    %493 = vmatpush1.msra.mxu0 0.0
    %494 = vmatprep.subr.mxu0 0.0
    %495 = vmatpush1.msra.mxu0 0.0
    %496 = vmatprep.subr.mxu0 0.0
    %497 = vmatpush1.msra.mxu0 0.0
    %498 = vmatprep.subr.mxu0 0.0
    %499 = vmatpush1.msra.mxu0 0.0
    %500 = vmatprep.subr.mxu0 0.0
    %501 = vmatpush1.msra.mxu0 0.0
    %502 = vmatprep.subr.mxu0 0.0
    %503 = vmatpush1.msra.mxu0 0.0
    %504 = vmatprep.subr.mxu0 0.0
    %505 = vmatpush1.msra.mxu0 0.0
    %506 = vmatprep.subr.mxu0 0.0
    %507 = vmatpush1.msra.mxu0 0.0
    %508 = vmatprep.subr.mxu0 0.0
    %509 = vmatpush1.msra.mxu0 0.0
    %510 = vmatprep.subr.mxu0 0.0
    %511 = vmatpush1.msra.mxu0 0.0
    %512 = vmatprep.subr.mxu0 0.0
    %513 = vmatpush1.msra.mxu0 0.0
    %514 = vmatprep.subr.mxu0 0.0
    %515 = vmatpush1.msra.mxu0 0.0
    %516 = vmatprep.subr.mxu0 0.0
    %517 = vmatpush1.msra.mxu0 0.0
    %518 = vmatprep.subr.mxu0 0.0
    %519 = vmatpush1.msra.mxu0 0.0
    %520 = vmatprep.subr.mxu0 0.0
    %521 = vmatpush1.msra.mxu0 0.0
    %522 = vmatprep.subr.mxu0 0.0
    %523 = vmatpush1.msra.mxu0 0.0
    %524 = vmatprep.subr.mxu0 0.0
    %525 = vmatpush1.msra.mxu0 0.0
    %526 = vmatprep.subr.mxu0 0.0
    %527 = vmatpush1.msra.mxu0 0.0
    %528 = vmatprep.subr.mxu0 0.0
    %529 = vmatpush1.msra.mxu0 0.0
    %530 = vmatprep.subr.mxu0 0.0
    %531 = vmatpush1.msra.mxu0 0.0
    %532 = vmatprep.subr.mxu0 0.0
    %533 = vmatpush1.msra.mxu0 0.0
    %534 = vmatprep.subr.mxu0 0.0
    %535 = vmatpush1.msra.mxu0 0.0
    %536 = vmatprep.subr.mxu0 0.0
    %537 = vmatpush1.msra.mxu0 0.0
    %538 = vmatprep.subr.mxu0 0.0
    %539 = vmatpush1.msra.mxu0 0.0
    %540 = vmatprep.subr.mxu0 0.0
    %541 = vmatpush1.msra.mxu0 0.0
    %542 = vmatprep.subr.mxu0 0.0
    %543 = vmatpush1.msra.mxu0 0.0
    %544 = vmatprep.subr.mxu0 0.0
    %545 = vmatpush1.msra.mxu0 0.0
    %546 = vmatprep.subr.mxu0 0.0
    %547 = vmatpush1.msra.mxu0 0.0
    %548 = vmatprep.subr.mxu0 0.0
    %549 = vmatpush1.msra.mxu0 0.0
    %550 = vmatprep.mubr.f32.mxu0 0.0
    %551 = vmatmul.mubr.f32.gmra.mrb[0].mxu0 %v475
    %v552 = vpop.f32.mrb[0].mxu0
    %v553 = vadd.f32 0.0, %v552
    %v554 = vpop.f32.mrb[0].mxu0
    %555 = vmatprep.mubr.f32.mxu0 0.0
    %556 = vmatmul.mubr.f32.gmra.mrb[0].mxu0 %v478
    %v557 = vpop.f32.mrb[0].mxu0
    %v558 = vadd.f32 0.0, %v557
    %v559 = vpop.f32.mrb[0].mxu0
    %560 = vmatprep.mubr.f32.mxu0 0.0
    %561 = vmatmul.mubr.f32.gmra.mrb[0].mxu0 %v481
    %v562 = vpop.f32.mrb[0].mxu0
    %v563 = vadd.f32 0.0, %v562
    %v564 = vpop.f32.mrb[0].mxu0
    %565 = vmatprep.mubr.f32.mxu0 0.0
    %566 = vmatmul.mubr.f32.gmra.mrb[0].mxu0 %v484
    %v567 = vpop.f32.mrb[0].mxu0
    %v568 = vadd.f32 0.0, %v567
    %v569 = vpop.f32.mrb[0].mxu0
    %570 = vdwg.mxu0
    %v571 = vsel %vm237, %v382, 0.0
    %v572 = vsel %vm237, %v388, 0.0
    %v573 = vadd.f32 %v571, %v572
    %v574 = vrot.slane %v573, 4
    %v575 = vadd.f32 %v573, %v574
    %v576 = vrot.slane %v575, 2
    %v577 = vadd.f32 %v575, %v576
    %v578 = vrot.slane %v577, 1
    %v579 = vadd.f32 %v577, %v578
    %vm580 = vcmask 785920
    %v581 = vsel %vm580, %v380, 0.0
    %v582 = vsel %vm580, %v386, 0.0
    %v583 = vadd.f32 %v581, %v582
    %v584 = vrot.slane %v583, 4
    %v585 = vadd.f32 %v583, %v584
    %v586 = vrot.slane %v585, 2
    %v587 = vadd.f32 %v585, %v586
    %v588 = vrot.slane %v587, 1
    %v589 = vadd.f32 %v587, %v588
    %v590 = vsel %vm237, %v380, 0
    %v592 = vsel %vm237, %v386, 0
    %594 = vmatprep.subr.mxu0 0.0
    %595 = vmatpush1.msra.mxu0 %v553
    %596 = vmatprep.subr.mxu0 0.0
    %597 = vmatpush1.msra.mxu0 %v558
    %598 = vmatprep.subr.mxu0 0.0
    %599 = vmatpush1.msra.mxu0 %v563
    %600 = vmatprep.subr.mxu0 0.0
    %601 = vmatpush1.msra.mxu0 %v568
    %602 = vmatprep.subr.mxu0 0.0
    %603 = vmatpush1.msra.mxu0 0.0
    %604 = vmatprep.subr.mxu0 0.0
    %605 = vmatpush1.msra.mxu0 0.0
    %606 = vmatprep.subr.mxu0 0.0
    %607 = vmatpush1.msra.mxu0 0.0
    %608 = vmatprep.subr.mxu0 0.0
    %609 = vmatpush1.msra.mxu0 0.0
    %610 = vmatprep.subr.mxu0 0.0
    %611 = vmatpush1.msra.mxu0 0.0
    %612 = vmatprep.subr.mxu0 0.0
    %613 = vmatpush1.msra.mxu0 0.0
    %614 = vmatprep.subr.mxu0 0.0
    %615 = vmatpush1.msra.mxu0 0.0
    %616 = vmatprep.subr.mxu0 0.0
    %617 = vmatpush1.msra.mxu0 0.0
    %618 = vmatprep.subr.mxu0 0.0
    %619 = vmatpush1.msra.mxu0 0.0
    %620 = vmatprep.subr.mxu0 0.0
    %621 = vmatpush1.msra.mxu0 0.0
    %622 = vmatprep.subr.mxu0 0.0
    %623 = vmatpush1.msra.mxu0 0.0
    %624 = vmatprep.subr.mxu0 0.0
    %625 = vmatpush1.msra.mxu0 0.0
    %626 = vmatprep.subr.mxu0 0.0
    %627 = vmatpush1.msra.mxu0 0.0
    %628 = vmatprep.subr.mxu0 0.0
    %629 = vmatpush1.msra.mxu0 0.0
    %630 = vmatprep.subr.mxu0 0.0
    %631 = vmatpush1.msra.mxu0 0.0
    %632 = vmatprep.subr.mxu0 0.0
    %633 = vmatpush1.msra.mxu0 0.0
    %634 = vmatprep.subr.mxu0 0.0
    %635 = vmatpush1.msra.mxu0 0.0
    %636 = vmatprep.subr.mxu0 0.0
    %637 = vmatpush1.msra.mxu0 0.0
    %638 = vmatprep.subr.mxu0 0.0
    %639 = vmatpush1.msra.mxu0 0.0
    %640 = vmatprep.subr.mxu0 0.0
    %641 = vmatpush1.msra.mxu0 0.0
    %642 = vmatprep.subr.mxu0 0.0
    %643 = vmatpush1.msra.mxu0 0.0
    %644 = vmatprep.subr.mxu0 0.0
    %645 = vmatpush1.msra.mxu0 0.0
    %646 = vmatprep.subr.mxu0 0.0
    %647 = vmatpush1.msra.mxu0 0.0
    %648 = vmatprep.subr.mxu0 0.0
    %649 = vmatpush1.msra.mxu0 0.0
    %650 = vmatprep.subr.mxu0 0.0
    %651 = vmatpush1.msra.mxu0 0.0
    %652 = vmatprep.subr.mxu0 0.0
    %653 = vmatpush1.msra.mxu0 0.0
    %654 = vmatprep.subr.mxu0 0.0
    %655 = vmatpush1.msra.mxu0 0.0
    %656 = vmatprep.subr.mxu0 0.0
    %657 = vmatpush1.msra.mxu0 0.0
    %658 = vmatprep.mubr.f32.mxu0 0.0
    %659 = vmatmul.mubr.f32.gmra.mrb[0].mxu0 %v590
    %v660 = vpop.f32.mrb[0].mxu0
    %v661 = vadd.f32 0.0, %v660
    %v662 = vpop.f32.mrb[0].mxu0
    %663 = vmatprep.mubr.f32.mxu0 0.0
    %664 = vmatmul.mubr.f32.gmra.mrb[0].mxu0 %v592
    %v665 = vpop.f32.mrb[0].mxu0
    %v666 = vadd.f32 0.0, %v665
    %v667 = vpop.f32.mrb[0].mxu0
    %668 = vdwg.mxu0
    %v669 = vstv %s433
    %v670 = vmul.f32 %v661, %v669
    %v671 = vmul.f32 %v666, %v669
    %v672 = vadd.f32 %v670, %v579
    %v673 = vadd.f32 %v671, %v579
    %675 = vrot.lane.b32.xlu0 %v589, 64
    %v676 = vpop.permute.xlu0 %675
    %v678 = vmul.f32 %v380, %v676
    %v679 = vmul.f32 %v386, %v676
    %v680 = vsel %vm237, %v678, 0.0
    %681 = vadd.xlane.f32.xlu0 %v680
    %v682 = vpop.xlane.xlu0 %681
    %v683 = vsel %vm237, %v679, 0.0
    %684 = vadd.xlane.f32.xlu0 %v683
    %v685 = vpop.xlane.xlu0 %684
    %v686 = vmul.f32 %v682, %v669
    %v687 = vmul.f32 %v685, %v669
    %v688 = vadd.f32 %v686, 16.0
    %v689 = vadd.f32 %v687, 16.0
    %v690 = vrcp.pop %v688
    %v691 = vrcp.pop %v689
    %v692 = vmul.f32 %v672, %v690
    %v693 = vmul.f32 %v673, %v691
    %v694 = vadd.f32 %v692, 0.0
    %v695 = vadd.f32 %v693, 0.0
    %696 = vrot.lane.b32.xlu0 %v380, 32
    %v697 = vpop.permute.xlu0 %696
    %698 = vrot.lane.b32.xlu0 %v386, 32
    %v699 = vpop.permute.xlu0 %698
    %702 = vxpose.xlu0.b32.start [1/16] %v697, 128
    %703 = vxpose.xlu0.b32.cont [2/16] %v699, 128
    %704 = vxpose.xlu0.b32.cont [3/16] 0.0, 128
    %705 = vxpose.xlu0.b32.cont [4/16] 0.0, 128
    %706 = vxpose.xlu0.b32.cont [5/16] 0.0, 128
    %707 = vxpose.xlu0.b32.cont [6/16] 0.0, 128
    %708 = vxpose.xlu0.b32.cont [7/16] 0.0, 128
    %709 = vxpose.xlu0.b32.cont [8/16] 0.0, 128
    %710 = vxpose.xlu0.b32.cont [9/16] 0.0, 128
    %711 = vxpose.xlu0.b32.cont [10/16] 0.0, 128
    %712 = vxpose.xlu0.b32.cont [11/16] 0.0, 128
    %713 = vxpose.xlu0.b32.cont [12/16] 0.0, 128
    %714 = vxpose.xlu0.b32.cont [13/16] 0.0, 128
    %715 = vxpose.xlu0.b32.cont [14/16] 0.0, 128
    %716 = vxpose.xlu0.b32.cont [15/16] 0.0, 128
    %717 = vxpose.xlu0.b32.end [16/16] 0.0, 128
    %v718 = vpop.trf.xlu0
    %v719 = vpop.trf.xlu0
    %v720 = vpop.trf.xlu0
    %v721 = vpop.trf.xlu0
    %v722 = vpop.trf.xlu0
    %v723 = vpop.trf.xlu0
    %v724 = vpop.trf.xlu0
    %v725 = vpop.trf.xlu0
    %v726 = vpop.trf.xlu0
    %v727 = vpop.trf.xlu0
    %v728 = vpop.trf.xlu0
    %v729 = vpop.trf.xlu0
    %v730 = vpop.trf.xlu0
    %v731 = vpop.trf.xlu0
    %v732 = vpop.trf.xlu0
    %v733 = vpop.trf.xlu0
    %736 = vrot.lane.b32.xlu0 %v382, 96
    %v737 = vpop.permute.xlu0 %736
    %738 = vrot.lane.b32.xlu0 %v388, 96
    %v739 = vpop.permute.xlu0 %738
    %v743 = vsel %vm153, %v718, 0
    %v746 = vsel %vm153, %v719, 0
    %v749 = vsel %vm153, %v720, 0
    %v752 = vsel %vm153, %v721, 0
    %754 = vmatprep.subr.mxu0 0.0
    %755 = vmatpush1.msra.mxu0 %v737
    %756 = vmatprep.subr.mxu0 0.0
    %757 = vmatpush1.msra.mxu0 %v739
    %758 = vmatprep.subr.mxu0 0.0
    %759 = vmatpush1.msra.mxu0 0.0
    %760 = vmatprep.subr.mxu0 0.0
    %761 = vmatpush1.msra.mxu0 0.0
    %762 = vmatprep.subr.mxu0 0.0
    %763 = vmatpush1.msra.mxu0 0.0
    %764 = vmatprep.subr.mxu0 0.0
    %765 = vmatpush1.msra.mxu0 0.0
    %766 = vmatprep.subr.mxu0 0.0
    %767 = vmatpush1.msra.mxu0 0.0
    %768 = vmatprep.subr.mxu0 0.0
    %769 = vmatpush1.msra.mxu0 0.0
    %770 = vmatprep.subr.mxu0 0.0
    %771 = vmatpush1.msra.mxu0 0.0
    %772 = vmatprep.subr.mxu0 0.0
    %773 = vmatpush1.msra.mxu0 0.0
    %774 = vmatprep.subr.mxu0 0.0
    %775 = vmatpush1.msra.mxu0 0.0
    %776 = vmatprep.subr.mxu0 0.0
    %777 = vmatpush1.msra.mxu0 0.0
    %778 = vmatprep.subr.mxu0 0.0
    %779 = vmatpush1.msra.mxu0 0.0
    %780 = vmatprep.subr.mxu0 0.0
    %781 = vmatpush1.msra.mxu0 0.0
    %782 = vmatprep.subr.mxu0 0.0
    %783 = vmatpush1.msra.mxu0 0.0
    %784 = vmatprep.subr.mxu0 0.0
    %785 = vmatpush1.msra.mxu0 0.0
    %786 = vmatprep.subr.mxu0 0.0
    %787 = vmatpush1.msra.mxu0 0.0
    %788 = vmatprep.subr.mxu0 0.0
    %789 = vmatpush1.msra.mxu0 0.0
    %790 = vmatprep.subr.mxu0 0.0
    %791 = vmatpush1.msra.mxu0 0.0
    %792 = vmatprep.subr.mxu0 0.0
    %793 = vmatpush1.msra.mxu0 0.0
    %794 = vmatprep.subr.mxu0 0.0
    %795 = vmatpush1.msra.mxu0 0.0
    %796 = vmatprep.subr.mxu0 0.0
    %797 = vmatpush1.msra.mxu0 0.0
    %798 = vmatprep.subr.mxu0 0.0
    %799 = vmatpush1.msra.mxu0 0.0
    %800 = vmatprep.subr.mxu0 0.0
    %801 = vmatpush1.msra.mxu0 0.0
    %802 = vmatprep.subr.mxu0 0.0
    %803 = vmatpush1.msra.mxu0 0.0
    %804 = vmatprep.subr.mxu0 0.0
    %805 = vmatpush1.msra.mxu0 0.0
    %806 = vmatprep.subr.mxu0 0.0
    %807 = vmatpush1.msra.mxu0 0.0
    %808 = vmatprep.subr.mxu0 0.0
    %809 = vmatpush1.msra.mxu0 0.0
    %810 = vmatprep.subr.mxu0 0.0
    %811 = vmatpush1.msra.mxu0 0.0
    %812 = vmatprep.subr.mxu0 0.0
    %813 = vmatpush1.msra.mxu0 0.0
    %814 = vmatprep.subr.mxu0 0.0
    %815 = vmatpush1.msra.mxu0 0.0
    %816 = vmatprep.subr.mxu0 0.0
    %817 = vmatpush1.msra.mxu0 0.0
    %818 = vmatprep.mubr.f32.mxu0 0.0
    %819 = vmatmul.mubr.f32.gmra.mrb[0].mxu0 %v743
    %v820 = vpop.f32.mrb[0].mxu0
    %v821 = vadd.f32 0.0, %v820
    %v822 = vpop.f32.mrb[0].mxu0
    %823 = vmatprep.mubr.f32.mxu0 0.0
    %824 = vmatmul.mubr.f32.gmra.mrb[0].mxu0 %v746
    %v825 = vpop.f32.mrb[0].mxu0
    %v826 = vadd.f32 0.0, %v825
    %v827 = vpop.f32.mrb[0].mxu0
    %828 = vmatprep.mubr.f32.mxu0 0.0
    %829 = vmatmul.mubr.f32.gmra.mrb[0].mxu0 %v749
    %v830 = vpop.f32.mrb[0].mxu0
    %v831 = vadd.f32 0.0, %v830
    %v832 = vpop.f32.mrb[0].mxu0
    %833 = vmatprep.mubr.f32.mxu0 0.0
    %834 = vmatmul.mubr.f32.gmra.mrb[0].mxu0 %v752
    %v835 = vpop.f32.mrb[0].mxu0
    %v836 = vadd.f32 0.0, %v835
    %v837 = vpop.f32.mrb[0].mxu0
    %838 = vdwg.mxu0
    %vm839 = vcmask 523520
    %v840 = vsel %vm839, %v382, 0.0
    %v841 = vsel %vm839, %v388, 0.0
    %v842 = vadd.f32 %v840, %v841
    %v843 = vrot.slane %v842, 4
    %v844 = vadd.f32 %v842, %v843
    %v845 = vrot.slane %v844, 2
    %v846 = vadd.f32 %v844, %v845
    %v847 = vrot.slane %v846, 1
    %v848 = vadd.f32 %v846, %v847
    %vm849 = vcmask 1048320
    %v850 = vsel %vm849, %v380, 0.0
    %v851 = vsel %vm849, %v386, 0.0
    %v852 = vadd.f32 %v850, %v851
    %v853 = vrot.slane %v852, 4
    %v854 = vadd.f32 %v852, %v853
    %v855 = vrot.slane %v854, 2
    %v856 = vadd.f32 %v854, %v855
    %v857 = vrot.slane %v856, 1
    %v858 = vadd.f32 %v856, %v857
    %859 = vrot.lane.b32.xlu0 %v380, 96
    %v860 = vpop.permute.xlu0 %859
    %861 = vrot.lane.b32.xlu0 %v386, 96
    %v862 = vpop.permute.xlu0 %861
    %v863 = vsel %vm237, %v860, 0
    %v865 = vsel %vm237, %v862, 0
    %867 = vmatprep.subr.mxu0 0.0
    %868 = vmatpush1.msra.mxu0 %v821
    %869 = vmatprep.subr.mxu0 0.0
    %870 = vmatpush1.msra.mxu0 %v826
    %871 = vmatprep.subr.mxu0 0.0
    %872 = vmatpush1.msra.mxu0 %v831
    %873 = vmatprep.subr.mxu0 0.0
    %874 = vmatpush1.msra.mxu0 %v836
    %875 = vmatprep.subr.mxu0 0.0
    %876 = vmatpush1.msra.mxu0 0.0
    %877 = vmatprep.subr.mxu0 0.0
    %878 = vmatpush1.msra.mxu0 0.0
    %879 = vmatprep.subr.mxu0 0.0
    %880 = vmatpush1.msra.mxu0 0.0
    %881 = vmatprep.subr.mxu0 0.0
    %882 = vmatpush1.msra.mxu0 0.0
    %883 = vmatprep.subr.mxu0 0.0
    %884 = vmatpush1.msra.mxu0 0.0
    %885 = vmatprep.subr.mxu0 0.0
    %886 = vmatpush1.msra.mxu0 0.0
    %887 = vmatprep.subr.mxu0 0.0
    %888 = vmatpush1.msra.mxu0 0.0
    %889 = vmatprep.subr.mxu0 0.0
    %890 = vmatpush1.msra.mxu0 0.0
    %891 = vmatprep.subr.mxu0 0.0
    %892 = vmatpush1.msra.mxu0 0.0
    %893 = vmatprep.subr.mxu0 0.0
    %894 = vmatpush1.msra.mxu0 0.0
    %895 = vmatprep.subr.mxu0 0.0
    %896 = vmatpush1.msra.mxu0 0.0
    %897 = vmatprep.subr.mxu0 0.0
    %898 = vmatpush1.msra.mxu0 0.0
    %899 = vmatprep.subr.mxu0 0.0
    %900 = vmatpush1.msra.mxu0 0.0
    %901 = vmatprep.subr.mxu0 0.0
    %902 = vmatpush1.msra.mxu0 0.0
    %903 = vmatprep.subr.mxu0 0.0
    %904 = vmatpush1.msra.mxu0 0.0
    %905 = vmatprep.subr.mxu0 0.0
    %906 = vmatpush1.msra.mxu0 0.0
    %907 = vmatprep.subr.mxu0 0.0
    %908 = vmatpush1.msra.mxu0 0.0
    %909 = vmatprep.subr.mxu0 0.0
    %910 = vmatpush1.msra.mxu0 0.0
    %911 = vmatprep.subr.mxu0 0.0
    %912 = vmatpush1.msra.mxu0 0.0
    %913 = vmatprep.subr.mxu0 0.0
    %914 = vmatpush1.msra.mxu0 0.0
    %915 = vmatprep.subr.mxu0 0.0
    %916 = vmatpush1.msra.mxu0 0.0
    %917 = vmatprep.subr.mxu0 0.0
    %918 = vmatpush1.msra.mxu0 0.0
    %919 = vmatprep.subr.mxu0 0.0
    %920 = vmatpush1.msra.mxu0 0.0
    %921 = vmatprep.subr.mxu0 0.0
    %922 = vmatpush1.msra.mxu0 0.0
    %923 = vmatprep.subr.mxu0 0.0
    %924 = vmatpush1.msra.mxu0 0.0
    %925 = vmatprep.subr.mxu0 0.0
    %926 = vmatpush1.msra.mxu0 0.0
    %927 = vmatprep.subr.mxu0 0.0
    %928 = vmatpush1.msra.mxu0 0.0
    %929 = vmatprep.subr.mxu0 0.0
    %930 = vmatpush1.msra.mxu0 0.0
    %931 = vmatprep.mubr.f32.mxu0 0.0
    %932 = vmatmul.mubr.f32.gmra.mrb[0].mxu0 %v863
    %v933 = vpop.f32.mrb[0].mxu0
    %v934 = vadd.f32 0.0, %v933
    %v935 = vpop.f32.mrb[0].mxu0
    %936 = vmatprep.mubr.f32.mxu0 0.0
    %937 = vmatmul.mubr.f32.gmra.mrb[0].mxu0 %v865
    %v938 = vpop.f32.mrb[0].mxu0
    %v939 = vadd.f32 0.0, %v938
    %v940 = vpop.f32.mrb[0].mxu0
    %941 = vdwg.mxu0
    %v942 = vmul.f32 %v934, %v669
    %v943 = vmul.f32 %v939, %v669
    %945 = vrot.lane.b32.xlu0 %v848, 96
    %v946 = vpop.permute.xlu0 %945
    %v948 = vadd.f32 %v942, %v946
    %v949 = vadd.f32 %v943, %v946
    %951 = vrot.lane.b32.xlu0 %v858, 64
    %v952 = vpop.permute.xlu0 %951
    %v954 = vmul.f32 %v380, %v952
    %v955 = vmul.f32 %v386, %v952
    %958 = vrot.lane.b32.xlu0 %v954, 96
    %v959 = vpop.permute.xlu0 %958
    %960 = vrot.lane.b32.xlu0 %v955, 96
    %v961 = vpop.permute.xlu0 %960
    %v964 = vsel %vm237, %v959, 0.0
    %965 = vadd.xlane.f32.xlu0 %v964
    %v966 = vpop.xlane.xlu0 %965
    %v967 = vsel %vm237, %v961, 0.0
    %968 = vadd.xlane.f32.xlu0 %v967
    %v969 = vpop.xlane.xlu0 %968
    %v970 = vmul.f32 %v966, %v669
    %v971 = vmul.f32 %v969, %v669
    %v972 = vadd.f32 %v970, 16.0
    %v973 = vadd.f32 %v971, 16.0
    %v974 = vrcp.pop %v972
    %v975 = vrcp.pop %v973
    %v976 = vmul.f32 %v948, %v974
    %v977 = vmul.f32 %v949, %v975
    %v978 = vadd.f32 %v694, %v976
    %v979 = vadd.f32 %v695, %v977
    %v980 = vmul.f32 %v978, 0.5
    %v981 = vmul.f32 %v979, 0.5
    %v982 = vmul.f32 %v980, 0.5
    %v983 = vmul.f32 %v981, 0.5
    %v984 = vmul.f32 %v285, 0.5
    %v985 = vmul.f32 %v286, 0.5
    %v986 = vadd.f32 %v982, %v984
    %v987 = vadd.f32 %v983, %v985
    %v988 = vld [vmem:[%s7] sm:$0x1]
    %v989 = vld [vmem:[#allocation14] sm:$0x1]
    %v990 = vsel %vm237, %v986, 0.0
    %991 = vadd.xlane.f32.xlu0 %v990
    %v992 = vpop.xlane.xlu0 %991
    %v993 = vsel %vm237, %v987, 0.0
    %994 = vadd.xlane.f32.xlu0 %v993
    %v995 = vpop.xlane.xlu0 %994
    %v996 = vmul.f32 %v992, %v244
    %v997 = vmul.f32 %v995, %v244
    %v998 = vmul.f32 %v986, %v986
    %v999 = vmul.f32 %v987, %v987
    %v1000 = vsel %vm237, %v998, 0.0
    %1001 = vadd.xlane.f32.xlu0 %v1000
    %v1002 = vpop.xlane.xlu0 %1001
    %v1003 = vsel %vm237, %v999, 0.0
    %1004 = vadd.xlane.f32.xlu0 %v1003
    %v1005 = vpop.xlane.xlu0 %1004
    %v1006 = vmul.f32 %v1002, %v244
    %v1007 = vmul.f32 %v1005, %v244
    %v1008 = vsub.f32 %v986, %v996
    %v1009 = vsub.f32 %v987, %v997
    %v1010 = vmul.f32 %v996, %v996
    %v1011 = vmul.f32 %v997, %v997
    %v1012 = vsub.f32 %v1006, %v1010
    %v1013 = vsub.f32 %v1007, %v1011
    %v1014 = vadd.f32 %v1012, 1e-05
    %v1015 = vadd.f32 %v1013, 1e-05
    %v1016 = vrsqrt.pop %v1014
    %v1017 = vrsqrt.pop %v1015
    %v1018 = vmul.f32 %v1008, %v1016
    %v1019 = vmul.f32 %v1009, %v1017
    %v1021 = vlaneseq
    %v1022 = vshrl.u32 %v1021, 7
    %v1023 = vsub.s32 0, %v1022
    %v1024 = vrot.slane %v988, %v1023
    %v1026 = vmul.f32 %v1018, %v1024
    %v1027 = vmul.f32 %v1019, %v1024
    %v1029 = vlaneseq
    %v1030 = vshrl.u32 %v1029, 7
    %v1031 = vsub.s32 0, %v1030
    %v1032 = vrot.slane %v989, %v1031
    %v1034 = vadd.f32 %v1026, %v1032
    %v1035 = vadd.f32 %v1027, %v1032
    %s1036 = scalar_lea.vmem [#allocation11], 64
    %v1037 = vld [vmem:[%s1036] sm:$0xff]
    %v1038 = vld [vmem:[%s1036 + $0x8] sm:$0xff]
    %v1039 = vld [vmem:[%s1036 + $0x10] sm:$0xff]
    %v1040 = vld [vmem:[%s1036 + $0x18] sm:$0xff]
    %v1041 = vld [vmem:[%s1036 + $0x20] sm:$0xff]
    %v1042 = vld [vmem:[%s1036 + $0x28] sm:$0xff]
    %v1043 = vld [vmem:[%s1036 + $0x30] sm:$0xff]
    %v1044 = vld [vmem:[%s1036 + $0x38] sm:$0xff]
    %s1045 = scalar_lea.vmem [#allocation13], 2
    %v1046 = vld [vmem:[%s1045] sm:$0x3]
    %v1048 = vlaneseq
    %v1049 = vshrl.u32 %v1048, 7
    %v1050 = vsub.s32 0, %v1049
    %v1051 = vrot.slane %v1046, %v1050
    %v1052 = vlaneseq
    %v1053 = vshrl.u32 %v1052, 7
    %v1054 = vsub.s32 1, %v1053
    %v1055 = vrot.slane %v1046, %v1054
    %v1059 = vsel %vm237, %v1034, 0
    %v1062 = vsel %vm237, %v1035, 0
    %1064 = vmatprep.subr.mxu0 %v1038
    %1065 = vmatpush1.msra.mxu0 %v1037
    %1066 = vmatprep.subr.mxu0 %v1040
    %1067 = vmatpush1.msra.mxu0 %v1039
    %1068 = vmatprep.subr.mxu0 %v1042
    %1069 = vmatpush1.msra.mxu0 %v1041
    %1070 = vmatprep.subr.mxu0 %v1044
    %1071 = vmatpush1.msra.mxu0 %v1043
    %1072 = vmatprep.subr.mxu0 0.0
    %1073 = vmatpush1.msra.mxu0 0.0
    %1074 = vmatprep.subr.mxu0 0.0
    %1075 = vmatpush1.msra.mxu0 0.0
    %1076 = vmatprep.subr.mxu0 0.0
    %1077 = vmatpush1.msra.mxu0 0.0
    %1078 = vmatprep.subr.mxu0 0.0
    %1079 = vmatpush1.msra.mxu0 0.0
    %1080 = vmatprep.subr.mxu0 0.0
    %1081 = vmatpush1.msra.mxu0 0.0
    %1082 = vmatprep.subr.mxu0 0.0
    %1083 = vmatpush1.msra.mxu0 0.0
    %1084 = vmatprep.subr.mxu0 0.0
    %1085 = vmatpush1.msra.mxu0 0.0
    %1086 = vmatprep.subr.mxu0 0.0
    %1087 = vmatpush1.msra.mxu0 0.0
    %1088 = vmatprep.subr.mxu0 0.0
    %1089 = vmatpush1.msra.mxu0 0.0
    %1090 = vmatprep.subr.mxu0 0.0
    %1091 = vmatpush1.msra.mxu0 0.0
    %1092 = vmatprep.subr.mxu0 0.0
    %1093 = vmatpush1.msra.mxu0 0.0
    %1094 = vmatprep.subr.mxu0 0.0
    %1095 = vmatpush1.msra.mxu0 0.0
    %1096 = vmatprep.subr.mxu0 0.0
    %1097 = vmatpush1.msra.mxu0 0.0
    %1098 = vmatprep.subr.mxu0 0.0
    %1099 = vmatpush1.msra.mxu0 0.0
    %1100 = vmatprep.subr.mxu0 0.0
    %1101 = vmatpush1.msra.mxu0 0.0
    %1102 = vmatprep.subr.mxu0 0.0
    %1103 = vmatpush1.msra.mxu0 0.0
    %1104 = vmatprep.subr.mxu0 0.0
    %1105 = vmatpush1.msra.mxu0 0.0
    %1106 = vmatprep.subr.mxu0 0.0
    %1107 = vmatpush1.msra.mxu0 0.0
    %1108 = vmatprep.subr.mxu0 0.0
    %1109 = vmatpush1.msra.mxu0 0.0
    %1110 = vmatprep.subr.mxu0 0.0
    %1111 = vmatpush1.msra.mxu0 0.0
    %1112 = vmatprep.subr.mxu0 0.0
    %1113 = vmatpush1.msra.mxu0 0.0
    %1114 = vmatprep.subr.mxu0 0.0
    %1115 = vmatpush1.msra.mxu0 0.0
    %1116 = vmatprep.subr.mxu0 0.0
    %1117 = vmatpush1.msra.mxu0 0.0
    %1118 = vmatprep.subr.mxu0 0.0
    %1119 = vmatpush1.msra.mxu0 0.0
    %1120 = vmatprep.subr.mxu0 0.0
    %1121 = vmatpush1.msra.mxu0 0.0
    %1122 = vmatprep.subr.mxu0 0.0
    %1123 = vmatpush1.msra.mxu0 0.0
    %1124 = vmatprep.subr.mxu0 0.0
    %1125 = vmatpush1.msra.mxu0 0.0
    %1126 = vmatprep.subr.mxu0 0.0
    %1127 = vmatpush1.msra.mxu0 0.0
    %1128 = vmatprep.mubr.f32.mxu0 0.0
    %1129 = vmatmul.mubr.f32.gmra.mrb[0].mxu0 %v1059
    %v1130 = vpop.f32.mrb[0].mxu0
    %v1131 = vadd.f32 %v1051, %v1130
    %v1132 = vpop.f32.mrb[0].mxu0
    %v1133 = vadd.f32 %v1055, %v1132
    %1134 = vmatprep.mubr.f32.mxu0 0.0
    %1135 = vmatmul.mubr.f32.gmra.mrb[0].mxu0 %v1062
    %v1136 = vpop.f32.mrb[0].mxu0
    %v1137 = vadd.f32 %v1051, %v1136
    %v1138 = vpop.f32.mrb[0].mxu0
    %v1139 = vadd.f32 %v1055, %v1138
    %1140 = vdwg.mxu0
    %v1141 = vmul.f32 %v1131, %v1131
    %v1142 = vmul.f32 %v1137, %v1137
    %v1143 = vsel %vm392, %v1141, 0.0
    %v1144 = vsel %vm392, %v1142, 0.0
    %v1145 = vadd.f32 %v1143, %v1144
    %1146 = vadd.xlane.f32.xlu0 %v1145
    %v1147 = vpop.xlane.xlu0 %1146
    %v1148 = vrot.slane %v1147, 4
    %v1149 = vadd.f32 %v1147, %v1148
    %v1150 = vrot.slane %v1149, 2
    %v1151 = vadd.f32 %v1149, %v1150
    %v1152 = vrot.slane %v1151, 1
    %v1153 = vadd.f32 %v1151, %v1152
    %s1154 = vtos %v1153
    %s1155 = sadd.f32 %s1154, 1e-12
    %v1156 = vstv %s1155
    %v1157 = vrsqrt.pop %v1156
    %s1158 = vtos %v1157
    %1161 = vrot.lane.b32.xlu0 %v1141, 64
    %v1162 = vpop.permute.xlu0 %1161
    %1163 = vrot.lane.b32.xlu0 %v1142, 64
    %v1164 = vpop.permute.xlu0 %1163
    %v1167 = vsel %vm392, %v1162, 0.0
    %v1168 = vsel %vm392, %v1164, 0.0
    %v1169 = vadd.f32 %v1167, %v1168
    %1170 = vadd.xlane.f32.xlu0 %v1169
    %v1171 = vpop.xlane.xlu0 %1170
    %v1172 = vrot.slane %v1171, 4
    %v1173 = vadd.f32 %v1171, %v1172
    %v1174 = vrot.slane %v1173, 2
    %v1175 = vadd.f32 %v1173, %v1174
    %v1176 = vrot.slane %v1175, 1
    %v1177 = vadd.f32 %v1175, %v1176
    %s1178 = vtos %v1177
    %s1179 = sadd.f32 %s1178, 1e-12
    %v1180 = vstv %s1179
    %v1181 = vrsqrt.pop %v1180
    %s1182 = vtos %v1181
    %s1183 = smul.f32 %s1158, %s1182
    %1186 = vrot.lane.b32.xlu0 %v1131, 64
    %v1187 = vpop.permute.xlu0 %1186
    %1188 = vrot.lane.b32.xlu0 %v1137, 64
    %v1189 = vpop.permute.xlu0 %1188
    %1192 = vxpose.xlu0.b32.start [1/16] %v1187, 128
    %1193 = vxpose.xlu0.b32.cont [2/16] %v1189, 128
    %1194 = vxpose.xlu0.b32.cont [3/16] 0.0, 128
    %1195 = vxpose.xlu0.b32.cont [4/16] 0.0, 128
    %1196 = vxpose.xlu0.b32.cont [5/16] 0.0, 128
    %1197 = vxpose.xlu0.b32.cont [6/16] 0.0, 128
    %1198 = vxpose.xlu0.b32.cont [7/16] 0.0, 128
    %1199 = vxpose.xlu0.b32.cont [8/16] 0.0, 128
    %1200 = vxpose.xlu0.b32.cont [9/16] 0.0, 128
    %1201 = vxpose.xlu0.b32.cont [10/16] 0.0, 128
    %1202 = vxpose.xlu0.b32.cont [11/16] 0.0, 128
    %1203 = vxpose.xlu0.b32.cont [12/16] 0.0, 128
    %1204 = vxpose.xlu0.b32.cont [13/16] 0.0, 128
    %1205 = vxpose.xlu0.b32.cont [14/16] 0.0, 128
    %1206 = vxpose.xlu0.b32.cont [15/16] 0.0, 128
    %1207 = vxpose.xlu0.b32.end [16/16] 0.0, 128
    %v1208 = vpop.trf.xlu0
    %v1209 = vpop.trf.xlu0
    %v1210 = vpop.trf.xlu0
    %v1211 = vpop.trf.xlu0
    %v1212 = vpop.trf.xlu0
    %v1213 = vpop.trf.xlu0
    %v1214 = vpop.trf.xlu0
    %v1215 = vpop.trf.xlu0
    %v1216 = vpop.trf.xlu0
    %v1217 = vpop.trf.xlu0
    %v1218 = vpop.trf.xlu0
    %v1219 = vpop.trf.xlu0
    %v1220 = vpop.trf.xlu0
    %v1221 = vpop.trf.xlu0
    %v1222 = vpop.trf.xlu0
    %v1223 = vpop.trf.xlu0
    %v1225 = vsel %vm153, %v1208, 0
    %v1228 = vsel %vm153, %v1209, 0
    %v1231 = vsel %vm153, %v1210, 0
    %v1234 = vsel %vm153, %v1211, 0
    %1236 = vmatprep.subr.mxu0 0.0
    %1237 = vmatpush1.msra.mxu0 %v1133
    %1238 = vmatprep.subr.mxu0 0.0
    %1239 = vmatpush1.msra.mxu0 %v1139
    %1240 = vmatprep.subr.mxu0 0.0
    %1241 = vmatpush1.msra.mxu0 0.0
    %1242 = vmatprep.subr.mxu0 0.0
    %1243 = vmatpush1.msra.mxu0 0.0
    %1244 = vmatprep.subr.mxu0 0.0
    %1245 = vmatpush1.msra.mxu0 0.0
    %1246 = vmatprep.subr.mxu0 0.0
    %1247 = vmatpush1.msra.mxu0 0.0
    %1248 = vmatprep.subr.mxu0 0.0
    %1249 = vmatpush1.msra.mxu0 0.0
    %1250 = vmatprep.subr.mxu0 0.0
    %1251 = vmatpush1.msra.mxu0 0.0
    %1252 = vmatprep.subr.mxu0 0.0
    %1253 = vmatpush1.msra.mxu0 0.0
    %1254 = vmatprep.subr.mxu0 0.0
    %1255 = vmatpush1.msra.mxu0 0.0
    %1256 = vmatprep.subr.mxu0 0.0
    %1257 = vmatpush1.msra.mxu0 0.0
    %1258 = vmatprep.subr.mxu0 0.0
    %1259 = vmatpush1.msra.mxu0 0.0
    %1260 = vmatprep.subr.mxu0 0.0
    %1261 = vmatpush1.msra.mxu0 0.0
    %1262 = vmatprep.subr.mxu0 0.0
    %1263 = vmatpush1.msra.mxu0 0.0
    %1264 = vmatprep.subr.mxu0 0.0
    %1265 = vmatpush1.msra.mxu0 0.0
    %1266 = vmatprep.subr.mxu0 0.0
    %1267 = vmatpush1.msra.mxu0 0.0
    %1268 = vmatprep.subr.mxu0 0.0
    %1269 = vmatpush1.msra.mxu0 0.0
    %1270 = vmatprep.subr.mxu0 0.0
    %1271 = vmatpush1.msra.mxu0 0.0
    %1272 = vmatprep.subr.mxu0 0.0
    %1273 = vmatpush1.msra.mxu0 0.0
    %1274 = vmatprep.subr.mxu0 0.0
    %1275 = vmatpush1.msra.mxu0 0.0
    %1276 = vmatprep.subr.mxu0 0.0
    %1277 = vmatpush1.msra.mxu0 0.0
    %1278 = vmatprep.subr.mxu0 0.0
    %1279 = vmatpush1.msra.mxu0 0.0
    %1280 = vmatprep.subr.mxu0 0.0
    %1281 = vmatpush1.msra.mxu0 0.0
    %1282 = vmatprep.subr.mxu0 0.0
    %1283 = vmatpush1.msra.mxu0 0.0
    %1284 = vmatprep.subr.mxu0 0.0
    %1285 = vmatpush1.msra.mxu0 0.0
    %1286 = vmatprep.subr.mxu0 0.0
    %1287 = vmatpush1.msra.mxu0 0.0
    %1288 = vmatprep.subr.mxu0 0.0
    %1289 = vmatpush1.msra.mxu0 0.0
    %1290 = vmatprep.subr.mxu0 0.0
    %1291 = vmatpush1.msra.mxu0 0.0
    %1292 = vmatprep.subr.mxu0 0.0
    %1293 = vmatpush1.msra.mxu0 0.0
    %1294 = vmatprep.subr.mxu0 0.0
    %1295 = vmatpush1.msra.mxu0 0.0
    %1296 = vmatprep.subr.mxu0 0.0
    %1297 = vmatpush1.msra.mxu0 0.0
    %1298 = vmatprep.subr.mxu0 0.0
    %1299 = vmatpush1.msra.mxu0 0.0
    %1300 = vmatprep.mubr.f32.mxu0 0.0
    %1301 = vmatmul.mubr.f32.gmra.mrb[0].mxu0 %v1225
    %v1302 = vpop.f32.mrb[0].mxu0
    %v1303 = vadd.f32 0.0, %v1302
    %v1304 = vpop.f32.mrb[0].mxu0
    %1305 = vmatprep.mubr.f32.mxu0 0.0
    %1306 = vmatmul.mubr.f32.gmra.mrb[0].mxu0 %v1228
    %v1307 = vpop.f32.mrb[0].mxu0
    %v1308 = vadd.f32 0.0, %v1307
    %v1309 = vpop.f32.mrb[0].mxu0
    %1310 = vmatprep.mubr.f32.mxu0 0.0
    %1311 = vmatmul.mubr.f32.gmra.mrb[0].mxu0 %v1231
    %v1312 = vpop.f32.mrb[0].mxu0
    %v1313 = vadd.f32 0.0, %v1312
    %v1314 = vpop.f32.mrb[0].mxu0
    %1315 = vmatprep.mubr.f32.mxu0 0.0
    %1316 = vmatmul.mubr.f32.gmra.mrb[0].mxu0 %v1234
    %v1317 = vpop.f32.mrb[0].mxu0
    %v1318 = vadd.f32 0.0, %v1317
    %v1319 = vpop.f32.mrb[0].mxu0
    %1320 = vdwg.mxu0
    %v1321 = vsel %vm237, %v1133, 0.0
    %v1322 = vsel %vm237, %v1139, 0.0
    %v1323 = vadd.f32 %v1321, %v1322
    %v1324 = vrot.slane %v1323, 4
    %v1325 = vadd.f32 %v1323, %v1324
    %v1326 = vrot.slane %v1325, 2
    %v1327 = vadd.f32 %v1325, %v1326
    %v1328 = vrot.slane %v1327, 1
    %v1329 = vadd.f32 %v1327, %v1328
    %v1330 = vsel %vm580, %v1131, 0.0
    %v1331 = vsel %vm580, %v1137, 0.0
    %v1332 = vadd.f32 %v1330, %v1331
    %v1333 = vrot.slane %v1332, 4
    %v1334 = vadd.f32 %v1332, %v1333
    %v1335 = vrot.slane %v1334, 2
    %v1336 = vadd.f32 %v1334, %v1335
    %v1337 = vrot.slane %v1336, 1
    %v1338 = vadd.f32 %v1336, %v1337
    %v1339 = vsel %vm237, %v1131, 0
    %v1341 = vsel %vm237, %v1137, 0
    %1343 = vmatprep.subr.mxu0 0.0
    %1344 = vmatpush1.msra.mxu0 %v1303
    %1345 = vmatprep.subr.mxu0 0.0
    %1346 = vmatpush1.msra.mxu0 %v1308
    %1347 = vmatprep.subr.mxu0 0.0
    %1348 = vmatpush1.msra.mxu0 %v1313
    %1349 = vmatprep.subr.mxu0 0.0
    %1350 = vmatpush1.msra.mxu0 %v1318
    %1351 = vmatprep.subr.mxu0 0.0
    %1352 = vmatpush1.msra.mxu0 0.0
    %1353 = vmatprep.subr.mxu0 0.0
    %1354 = vmatpush1.msra.mxu0 0.0
    %1355 = vmatprep.subr.mxu0 0.0
    %1356 = vmatpush1.msra.mxu0 0.0
    %1357 = vmatprep.subr.mxu0 0.0
    %1358 = vmatpush1.msra.mxu0 0.0
    %1359 = vmatprep.subr.mxu0 0.0
    %1360 = vmatpush1.msra.mxu0 0.0
    %1361 = vmatprep.subr.mxu0 0.0
    %1362 = vmatpush1.msra.mxu0 0.0
    %1363 = vmatprep.subr.mxu0 0.0
    %1364 = vmatpush1.msra.mxu0 0.0
    %1365 = vmatprep.subr.mxu0 0.0
    %1366 = vmatpush1.msra.mxu0 0.0
    %1367 = vmatprep.subr.mxu0 0.0
    %1368 = vmatpush1.msra.mxu0 0.0
    %1369 = vmatprep.subr.mxu0 0.0
    %1370 = vmatpush1.msra.mxu0 0.0
    %1371 = vmatprep.subr.mxu0 0.0
    %1372 = vmatpush1.msra.mxu0 0.0
    %1373 = vmatprep.subr.mxu0 0.0
    %1374 = vmatpush1.msra.mxu0 0.0
    %1375 = vmatprep.subr.mxu0 0.0
    %1376 = vmatpush1.msra.mxu0 0.0
    %1377 = vmatprep.subr.mxu0 0.0
    %1378 = vmatpush1.msra.mxu0 0.0
    %1379 = vmatprep.subr.mxu0 0.0
    %1380 = vmatpush1.msra.mxu0 0.0
    %1381 = vmatprep.subr.mxu0 0.0
    %1382 = vmatpush1.msra.mxu0 0.0
    %1383 = vmatprep.subr.mxu0 0.0
    %1384 = vmatpush1.msra.mxu0 0.0
    %1385 = vmatprep.subr.mxu0 0.0
    %1386 = vmatpush1.msra.mxu0 0.0
    %1387 = vmatprep.subr.mxu0 0.0
    %1388 = vmatpush1.msra.mxu0 0.0
    %1389 = vmatprep.subr.mxu0 0.0
    %1390 = vmatpush1.msra.mxu0 0.0
    %1391 = vmatprep.subr.mxu0 0.0
    %1392 = vmatpush1.msra.mxu0 0.0
    %1393 = vmatprep.subr.mxu0 0.0
    %1394 = vmatpush1.msra.mxu0 0.0
    %1395 = vmatprep.subr.mxu0 0.0
    %1396 = vmatpush1.msra.mxu0 0.0
    %1397 = vmatprep.subr.mxu0 0.0
    %1398 = vmatpush1.msra.mxu0 0.0
    %1399 = vmatprep.subr.mxu0 0.0
    %1400 = vmatpush1.msra.mxu0 0.0
    %1401 = vmatprep.subr.mxu0 0.0
    %1402 = vmatpush1.msra.mxu0 0.0
    %1403 = vmatprep.subr.mxu0 0.0
    %1404 = vmatpush1.msra.mxu0 0.0
    %1405 = vmatprep.subr.mxu0 0.0
    %1406 = vmatpush1.msra.mxu0 0.0
    %1407 = vmatprep.mubr.f32.mxu0 0.0
    %1408 = vmatmul.mubr.f32.gmra.mrb[0].mxu0 %v1339
    %v1409 = vpop.f32.mrb[0].mxu0
    %v1410 = vadd.f32 0.0, %v1409
    %v1411 = vpop.f32.mrb[0].mxu0
    %1412 = vmatprep.mubr.f32.mxu0 0.0
    %1413 = vmatmul.mubr.f32.gmra.mrb[0].mxu0 %v1341
    %v1414 = vpop.f32.mrb[0].mxu0
    %v1415 = vadd.f32 0.0, %v1414
    %v1416 = vpop.f32.mrb[0].mxu0
    %1417 = vdwg.mxu0
    %v1418 = vstv %s1183
    %v1419 = vmul.f32 %v1410, %v1418
    %v1420 = vmul.f32 %v1415, %v1418
    %v1421 = vadd.f32 %v1419, %v1329
    %v1422 = vadd.f32 %v1420, %v1329
    %1424 = vrot.lane.b32.xlu0 %v1338, 64
    %v1425 = vpop.permute.xlu0 %1424
    %v1427 = vmul.f32 %v1131, %v1425
    %v1428 = vmul.f32 %v1137, %v1425
    %v1429 = vsel %vm237, %v1427, 0.0
    %1430 = vadd.xlane.f32.xlu0 %v1429
    %v1431 = vpop.xlane.xlu0 %1430
    %v1432 = vsel %vm237, %v1428, 0.0
    %1433 = vadd.xlane.f32.xlu0 %v1432
    %v1434 = vpop.xlane.xlu0 %1433
    %v1435 = vmul.f32 %v1431, %v1418
    %v1436 = vmul.f32 %v1434, %v1418
    %v1437 = vadd.f32 %v1435, 16.0
    %v1438 = vadd.f32 %v1436, 16.0
    %v1439 = vrcp.pop %v1437
    %v1440 = vrcp.pop %v1438
    %v1441 = vmul.f32 %v1421, %v1439
    %v1442 = vmul.f32 %v1422, %v1440
    %v1443 = vadd.f32 %v1441, 0.0
    %v1444 = vadd.f32 %v1442, 0.0
    %1445 = vrot.lane.b32.xlu0 %v1131, 32
    %v1446 = vpop.permute.xlu0 %1445
    %1447 = vrot.lane.b32.xlu0 %v1137, 32
    %v1448 = vpop.permute.xlu0 %1447
    %1451 = vxpose.xlu0.b32.start [1/16] %v1446, 128
    %1452 = vxpose.xlu0.b32.cont [2/16] %v1448, 128
    %1453 = vxpose.xlu0.b32.cont [3/16] 0.0, 128
    %1454 = vxpose.xlu0.b32.cont [4/16] 0.0, 128
    %1455 = vxpose.xlu0.b32.cont [5/16] 0.0, 128
    %1456 = vxpose.xlu0.b32.cont [6/16] 0.0, 128
    %1457 = vxpose.xlu0.b32.cont [7/16] 0.0, 128
    %1458 = vxpose.xlu0.b32.cont [8/16] 0.0, 128
    %1459 = vxpose.xlu0.b32.cont [9/16] 0.0, 128
    %1460 = vxpose.xlu0.b32.cont [10/16] 0.0, 128
    %1461 = vxpose.xlu0.b32.cont [11/16] 0.0, 128
    %1462 = vxpose.xlu0.b32.cont [12/16] 0.0, 128
    %1463 = vxpose.xlu0.b32.cont [13/16] 0.0, 128
    %1464 = vxpose.xlu0.b32.cont [14/16] 0.0, 128
    %1465 = vxpose.xlu0.b32.cont [15/16] 0.0, 128
    %1466 = vxpose.xlu0.b32.end [16/16] 0.0, 128
    %v1467 = vpop.trf.xlu0
    %v1468 = vpop.trf.xlu0
    %v1469 = vpop.trf.xlu0
    %v1470 = vpop.trf.xlu0
    %v1471 = vpop.trf.xlu0
    %v1472 = vpop.trf.xlu0
    %v1473 = vpop.trf.xlu0
    %v1474 = vpop.trf.xlu0
    %v1475 = vpop.trf.xlu0
    %v1476 = vpop.trf.xlu0
    %v1477 = vpop.trf.xlu0
    %v1478 = vpop.trf.xlu0
    %v1479 = vpop.trf.xlu0
    %v1480 = vpop.trf.xlu0
    %v1481 = vpop.trf.xlu0
    %v1482 = vpop.trf.xlu0
    %1485 = vrot.lane.b32.xlu0 %v1133, 96
    %v1486 = vpop.permute.xlu0 %1485
    %1487 = vrot.lane.b32.xlu0 %v1139, 96
    %v1488 = vpop.permute.xlu0 %1487
    %v1492 = vsel %vm153, %v1467, 0
    %v1495 = vsel %vm153, %v1468, 0
    %v1498 = vsel %vm153, %v1469, 0
    %v1501 = vsel %vm153, %v1470, 0
    %1503 = vmatprep.subr.mxu0 0.0
    %1504 = vmatpush1.msra.mxu0 %v1486
    %1505 = vmatprep.subr.mxu0 0.0
    %1506 = vmatpush1.msra.mxu0 %v1488
    %1507 = vmatprep.subr.mxu0 0.0
    %1508 = vmatpush1.msra.mxu0 0.0
    %1509 = vmatprep.subr.mxu0 0.0
    %1510 = vmatpush1.msra.mxu0 0.0
    %1511 = vmatprep.subr.mxu0 0.0
    %1512 = vmatpush1.msra.mxu0 0.0
    %1513 = vmatprep.subr.mxu0 0.0
    %1514 = vmatpush1.msra.mxu0 0.0
    %1515 = vmatprep.subr.mxu0 0.0
    %1516 = vmatpush1.msra.mxu0 0.0
    %1517 = vmatprep.subr.mxu0 0.0
    %1518 = vmatpush1.msra.mxu0 0.0
    %1519 = vmatprep.subr.mxu0 0.0
    %1520 = vmatpush1.msra.mxu0 0.0
    %1521 = vmatprep.subr.mxu0 0.0
    %1522 = vmatpush1.msra.mxu0 0.0
    %1523 = vmatprep.subr.mxu0 0.0
    %1524 = vmatpush1.msra.mxu0 0.0
    %1525 = vmatprep.subr.mxu0 0.0
    %1526 = vmatpush1.msra.mxu0 0.0
    %1527 = vmatprep.subr.mxu0 0.0
    %1528 = vmatpush1.msra.mxu0 0.0
    %1529 = vmatprep.subr.mxu0 0.0
    %1530 = vmatpush1.msra.mxu0 0.0
    %1531 = vmatprep.subr.mxu0 0.0
    %1532 = vmatpush1.msra.mxu0 0.0
    %1533 = vmatprep.subr.mxu0 0.0
    %1534 = vmatpush1.msra.mxu0 0.0
    %1535 = vmatprep.subr.mxu0 0.0
    %1536 = vmatpush1.msra.mxu0 0.0
    %1537 = vmatprep.subr.mxu0 0.0
    %1538 = vmatpush1.msra.mxu0 0.0
    %1539 = vmatprep.subr.mxu0 0.0
    %1540 = vmatpush1.msra.mxu0 0.0
    %1541 = vmatprep.subr.mxu0 0.0
    %1542 = vmatpush1.msra.mxu0 0.0
    %1543 = vmatprep.subr.mxu0 0.0
    %1544 = vmatpush1.msra.mxu0 0.0
    %1545 = vmatprep.subr.mxu0 0.0
    %1546 = vmatpush1.msra.mxu0 0.0
    %1547 = vmatprep.subr.mxu0 0.0
    %1548 = vmatpush1.msra.mxu0 0.0
    %1549 = vmatprep.subr.mxu0 0.0
    %1550 = vmatpush1.msra.mxu0 0.0
    %1551 = vmatprep.subr.mxu0 0.0
    %1552 = vmatpush1.msra.mxu0 0.0
    %1553 = vmatprep.subr.mxu0 0.0
    %1554 = vmatpush1.msra.mxu0 0.0
    %1555 = vmatprep.subr.mxu0 0.0
    %1556 = vmatpush1.msra.mxu0 0.0
    %1557 = vmatprep.subr.mxu0 0.0
    %1558 = vmatpush1.msra.mxu0 0.0
    %1559 = vmatprep.subr.mxu0 0.0
    %1560 = vmatpush1.msra.mxu0 0.0
    %1561 = vmatprep.subr.mxu0 0.0
    %1562 = vmatpush1.msra.mxu0 0.0
    %1563 = vmatprep.subr.mxu0 0.0
    %1564 = vmatpush1.msra.mxu0 0.0
    %1565 = vmatprep.subr.mxu0 0.0
    %1566 = vmatpush1.msra.mxu0 0.0
    %1567 = vmatprep.mubr.f32.mxu0 0.0
    %1568 = vmatmul.mubr.f32.gmra.mrb[0].mxu0 %v1492
    %v1569 = vpop.f32.mrb[0].mxu0
    %v1570 = vadd.f32 0.0, %v1569
    %v1571 = vpop.f32.mrb[0].mxu0
    %1572 = vmatprep.mubr.f32.mxu0 0.0
    %1573 = vmatmul.mubr.f32.gmra.mrb[0].mxu0 %v1495
    %v1574 = vpop.f32.mrb[0].mxu0
    %v1575 = vadd.f32 0.0, %v1574
    %v1576 = vpop.f32.mrb[0].mxu0
    %1577 = vmatprep.mubr.f32.mxu0 0.0
    %1578 = vmatmul.mubr.f32.gmra.mrb[0].mxu0 %v1498
    %v1579 = vpop.f32.mrb[0].mxu0
    %v1580 = vadd.f32 0.0, %v1579
    %v1581 = vpop.f32.mrb[0].mxu0
    %1582 = vmatprep.mubr.f32.mxu0 0.0
    %1583 = vmatmul.mubr.f32.gmra.mrb[0].mxu0 %v1501
    %v1584 = vpop.f32.mrb[0].mxu0
    %v1585 = vadd.f32 0.0, %v1584
    %v1586 = vpop.f32.mrb[0].mxu0
    %1587 = vdwg.mxu0
    %v1588 = vsel %vm839, %v1133, 0.0
    %v1589 = vsel %vm839, %v1139, 0.0
    %v1590 = vadd.f32 %v1588, %v1589
    %v1591 = vrot.slane %v1590, 4
    %v1592 = vadd.f32 %v1590, %v1591
    %v1593 = vrot.slane %v1592, 2
    %v1594 = vadd.f32 %v1592, %v1593
    %v1595 = vrot.slane %v1594, 1
    %v1596 = vadd.f32 %v1594, %v1595
    %v1597 = vsel %vm849, %v1131, 0.0
    %v1598 = vsel %vm849, %v1137, 0.0
    %v1599 = vadd.f32 %v1597, %v1598
    %v1600 = vrot.slane %v1599, 4
    %v1601 = vadd.f32 %v1599, %v1600
    %v1602 = vrot.slane %v1601, 2
    %v1603 = vadd.f32 %v1601, %v1602
    %v1604 = vrot.slane %v1603, 1
    %v1605 = vadd.f32 %v1603, %v1604
    %1606 = vrot.lane.b32.xlu0 %v1131, 96
    %v1607 = vpop.permute.xlu0 %1606
    %1608 = vrot.lane.b32.xlu0 %v1137, 96
    %v1609 = vpop.permute.xlu0 %1608
    %v1610 = vsel %vm237, %v1607, 0
    %v1612 = vsel %vm237, %v1609, 0
    %1614 = vmatprep.subr.mxu0 0.0
    %1615 = vmatpush1.msra.mxu0 %v1570
    %1616 = vmatprep.subr.mxu0 0.0
    %1617 = vmatpush1.msra.mxu0 %v1575
    %1618 = vmatprep.subr.mxu0 0.0
    %1619 = vmatpush1.msra.mxu0 %v1580
    %1620 = vmatprep.subr.mxu0 0.0
    %1621 = vmatpush1.msra.mxu0 %v1585
    %1622 = vmatprep.subr.mxu0 0.0
    %1623 = vmatpush1.msra.mxu0 0.0
    %1624 = vmatprep.subr.mxu0 0.0
    %1625 = vmatpush1.msra.mxu0 0.0
    %1626 = vmatprep.subr.mxu0 0.0
    %1627 = vmatpush1.msra.mxu0 0.0
    %1628 = vmatprep.subr.mxu0 0.0
    %1629 = vmatpush1.msra.mxu0 0.0
    %1630 = vmatprep.subr.mxu0 0.0
    %1631 = vmatpush1.msra.mxu0 0.0
    %1632 = vmatprep.subr.mxu0 0.0
    %1633 = vmatpush1.msra.mxu0 0.0
    %1634 = vmatprep.subr.mxu0 0.0
    %1635 = vmatpush1.msra.mxu0 0.0
    %1636 = vmatprep.subr.mxu0 0.0
    %1637 = vmatpush1.msra.mxu0 0.0
    %1638 = vmatprep.subr.mxu0 0.0
    %1639 = vmatpush1.msra.mxu0 0.0
    %1640 = vmatprep.subr.mxu0 0.0
    %1641 = vmatpush1.msra.mxu0 0.0
    %1642 = vmatprep.subr.mxu0 0.0
    %1643 = vmatpush1.msra.mxu0 0.0
    %1644 = vmatprep.subr.mxu0 0.0
    %1645 = vmatpush1.msra.mxu0 0.0
    %1646 = vmatprep.subr.mxu0 0.0
    %1647 = vmatpush1.msra.mxu0 0.0
    %1648 = vmatprep.subr.mxu0 0.0
    %1649 = vmatpush1.msra.mxu0 0.0
    %1650 = vmatprep.subr.mxu0 0.0
    %1651 = vmatpush1.msra.mxu0 0.0
    %1652 = vmatprep.subr.mxu0 0.0
    %1653 = vmatpush1.msra.mxu0 0.0
    %1654 = vmatprep.subr.mxu0 0.0
    %1655 = vmatpush1.msra.mxu0 0.0
    %1656 = vmatprep.subr.mxu0 0.0
    %1657 = vmatpush1.msra.mxu0 0.0
    %1658 = vmatprep.subr.mxu0 0.0
    %1659 = vmatpush1.msra.mxu0 0.0
    %1660 = vmatprep.subr.mxu0 0.0
    %1661 = vmatpush1.msra.mxu0 0.0
    %1662 = vmatprep.subr.mxu0 0.0
    %1663 = vmatpush1.msra.mxu0 0.0
    %1664 = vmatprep.subr.mxu0 0.0
    %1665 = vmatpush1.msra.mxu0 0.0
    %1666 = vmatprep.subr.mxu0 0.0
    %1667 = vmatpush1.msra.mxu0 0.0
    %1668 = vmatprep.subr.mxu0 0.0
    %1669 = vmatpush1.msra.mxu0 0.0
    %1670 = vmatprep.subr.mxu0 0.0
    %1671 = vmatpush1.msra.mxu0 0.0
    %1672 = vmatprep.subr.mxu0 0.0
    %1673 = vmatpush1.msra.mxu0 0.0
    %1674 = vmatprep.subr.mxu0 0.0
    %1675 = vmatpush1.msra.mxu0 0.0
    %1676 = vmatprep.subr.mxu0 0.0
    %1677 = vmatpush1.msra.mxu0 0.0
    %1678 = vmatprep.mubr.f32.mxu0 0.0
    %1679 = vmatmul.mubr.f32.gmra.mrb[0].mxu0 %v1610
    %v1680 = vpop.f32.mrb[0].mxu0
    %v1681 = vadd.f32 0.0, %v1680
    %v1682 = vpop.f32.mrb[0].mxu0
    %1683 = vmatprep.mubr.f32.mxu0 0.0
    %1684 = vmatmul.mubr.f32.gmra.mrb[0].mxu0 %v1612
    %v1685 = vpop.f32.mrb[0].mxu0
    %v1686 = vadd.f32 0.0, %v1685
    %v1687 = vpop.f32.mrb[0].mxu0
    %1688 = vdwg.mxu0
    %v1689 = vmul.f32 %v1681, %v1418
    %v1690 = vmul.f32 %v1686, %v1418
    %1692 = vrot.lane.b32.xlu0 %v1596, 96
    %v1693 = vpop.permute.xlu0 %1692
    %v1695 = vadd.f32 %v1689, %v1693
    %v1696 = vadd.f32 %v1690, %v1693
    %1698 = vrot.lane.b32.xlu0 %v1605, 64
    %v1699 = vpop.permute.xlu0 %1698
    %v1701 = vmul.f32 %v1131, %v1699
    %v1702 = vmul.f32 %v1137, %v1699
    %1705 = vrot.lane.b32.xlu0 %v1701, 96
    %v1706 = vpop.permute.xlu0 %1705
    %1707 = vrot.lane.b32.xlu0 %v1702, 96
    %v1708 = vpop.permute.xlu0 %1707
    %v1711 = vsel %vm237, %v1706, 0.0
    %1712 = vadd.xlane.f32.xlu0 %v1711
    %v1713 = vpop.xlane.xlu0 %1712
    %v1714 = vsel %vm237, %v1708, 0.0
    %1715 = vadd.xlane.f32.xlu0 %v1714
    %v1716 = vpop.xlane.xlu0 %1715
    %v1717 = vmul.f32 %v1713, %v1418
    %v1718 = vmul.f32 %v1716, %v1418
    %v1719 = vadd.f32 %v1717, 16.0
    %v1720 = vadd.f32 %v1718, 16.0
    %v1721 = vrcp.pop %v1719
    %v1722 = vrcp.pop %v1720
    %v1723 = vmul.f32 %v1695, %v1721
    %v1724 = vmul.f32 %v1696, %v1722
    %v1725 = vadd.f32 %v1443, %v1723
    %v1726 = vadd.f32 %v1444, %v1724
    %v1727 = vmul.f32 %v1725, 0.5
    %v1728 = vmul.f32 %v1726, 0.5
    %v1729 = vmul.f32 %v1727, 0.5
    %v1730 = vmul.f32 %v1728, 0.5
    %v1731 = vmul.f32 %v1034, 0.5
    %v1732 = vmul.f32 %v1035, 0.5
    %v1733 = vadd.f32 %v1729, %v1731
    %v1734 = vadd.f32 %v1730, %v1732
    %s1735 = scalar_lea.vmem %s7, 1
    %v1736 = vld [vmem:[%s1735] sm:$0x1]
    %s1737 = scalar_lea.vmem [#allocation14], 1
    %v1738 = vld [vmem:[%s1737] sm:$0x1]
    %v1739 = vsel %vm237, %v1733, 0.0
    %1740 = vadd.xlane.f32.xlu0 %v1739
    %v1741 = vpop.xlane.xlu0 %1740
    %v1742 = vsel %vm237, %v1734, 0.0
    %1743 = vadd.xlane.f32.xlu0 %v1742
    %v1744 = vpop.xlane.xlu0 %1743
    %v1745 = vmul.f32 %v1741, %v244
    %v1746 = vmul.f32 %v1744, %v244
    %v1747 = vmul.f32 %v1733, %v1733
    %v1748 = vmul.f32 %v1734, %v1734
    %v1749 = vsel %vm237, %v1747, 0.0
    %1750 = vadd.xlane.f32.xlu0 %v1749
    %v1751 = vpop.xlane.xlu0 %1750
    %v1752 = vsel %vm237, %v1748, 0.0
    %1753 = vadd.xlane.f32.xlu0 %v1752
    %v1754 = vpop.xlane.xlu0 %1753
    %v1755 = vmul.f32 %v1751, %v244
    %v1756 = vmul.f32 %v1754, %v244
    %v1757 = vsub.f32 %v1733, %v1745
    %v1758 = vsub.f32 %v1734, %v1746
    %v1759 = vmul.f32 %v1745, %v1745
    %v1760 = vmul.f32 %v1746, %v1746
    %v1761 = vsub.f32 %v1755, %v1759
    %v1762 = vsub.f32 %v1756, %v1760
    %v1763 = vadd.f32 %v1761, 1e-05
    %v1764 = vadd.f32 %v1762, 1e-05
    %v1765 = vrsqrt.pop %v1763
    %v1766 = vrsqrt.pop %v1764
    %v1767 = vmul.f32 %v1757, %v1765
    %v1768 = vmul.f32 %v1758, %v1766
    %v1770 = vlaneseq
    %v1771 = vshrl.u32 %v1770, 7
    %v1772 = vsub.s32 0, %v1771
    %v1773 = vrot.slane %v1736, %v1772
    %v1775 = vmul.f32 %v1767, %v1773
    %v1776 = vmul.f32 %v1768, %v1773
    %v1778 = vlaneseq
    %v1779 = vshrl.u32 %v1778, 7
    %v1780 = vsub.s32 0, %v1779
    %v1781 = vrot.slane %v1738, %v1780
    %v1783 = vadd.f32 %v1775, %v1781
    %v1784 = vadd.f32 %v1776, %v1781
    %v1785 = vld [vmem:[%s9] sm:$0xff]
    %v1786 = vld [vmem:[%s9 + $0x8] sm:$0xff]
    %v1787 = vld [vmem:[%s9 + $0x10] sm:$0xff]
    %v1788 = vld [vmem:[%s9 + $0x18] sm:$0xff]
    %v1789 = vld [vmem:[%s10] sm:$0x1]
    %v1791 = vlaneseq
    %v1792 = vshrl.u32 %v1791, 7
    %v1793 = vsub.s32 0, %v1792
    %v1794 = vrot.slane %v1789, %v1793
    %v1797 = vsel %vm237, %v1783, 0
    %v1800 = vsel %vm237, %v1784, 0
    %1802 = vmatprep.subr.mxu0 0.0
    %1803 = vmatpush1.msra.mxu0 %v1785
    %1804 = vmatprep.subr.mxu0 0.0
    %1805 = vmatpush1.msra.mxu0 %v1786
    %1806 = vmatprep.subr.mxu0 0.0
    %1807 = vmatpush1.msra.mxu0 %v1787
    %1808 = vmatprep.subr.mxu0 0.0
    %1809 = vmatpush1.msra.mxu0 %v1788
    %1810 = vmatprep.subr.mxu0 0.0
    %1811 = vmatpush1.msra.mxu0 0.0
    %1812 = vmatprep.subr.mxu0 0.0
    %1813 = vmatpush1.msra.mxu0 0.0
    %1814 = vmatprep.subr.mxu0 0.0
    %1815 = vmatpush1.msra.mxu0 0.0
    %1816 = vmatprep.subr.mxu0 0.0
    %1817 = vmatpush1.msra.mxu0 0.0
    %1818 = vmatprep.subr.mxu0 0.0
    %1819 = vmatpush1.msra.mxu0 0.0
    %1820 = vmatprep.subr.mxu0 0.0
    %1821 = vmatpush1.msra.mxu0 0.0
    %1822 = vmatprep.subr.mxu0 0.0
    %1823 = vmatpush1.msra.mxu0 0.0
    %1824 = vmatprep.subr.mxu0 0.0
    %1825 = vmatpush1.msra.mxu0 0.0
    %1826 = vmatprep.subr.mxu0 0.0
    %1827 = vmatpush1.msra.mxu0 0.0
    %1828 = vmatprep.subr.mxu0 0.0
    %1829 = vmatpush1.msra.mxu0 0.0
    %1830 = vmatprep.subr.mxu0 0.0
    %1831 = vmatpush1.msra.mxu0 0.0
    %1832 = vmatprep.subr.mxu0 0.0
    %1833 = vmatpush1.msra.mxu0 0.0
    %1834 = vmatprep.subr.mxu0 0.0
    %1835 = vmatpush1.msra.mxu0 0.0
    %1836 = vmatprep.subr.mxu0 0.0
    %1837 = vmatpush1.msra.mxu0 0.0
    %1838 = vmatprep.subr.mxu0 0.0
    %1839 = vmatpush1.msra.mxu0 0.0
    %1840 = vmatprep.subr.mxu0 0.0
    %1841 = vmatpush1.msra.mxu0 0.0
    %1842 = vmatprep.subr.mxu0 0.0
    %1843 = vmatpush1.msra.mxu0 0.0
    %1844 = vmatprep.subr.mxu0 0.0
    %1845 = vmatpush1.msra.mxu0 0.0
    %1846 = vmatprep.subr.mxu0 0.0
    %1847 = vmatpush1.msra.mxu0 0.0
    %1848 = vmatprep.subr.mxu0 0.0
    %1849 = vmatpush1.msra.mxu0 0.0
    %1850 = vmatprep.subr.mxu0 0.0
    %1851 = vmatpush1.msra.mxu0 0.0
    %1852 = vmatprep.subr.mxu0 0.0
    %1853 = vmatpush1.msra.mxu0 0.0
    %1854 = vmatprep.subr.mxu0 0.0
    %1855 = vmatpush1.msra.mxu0 0.0
    %1856 = vmatprep.subr.mxu0 0.0
    %1857 = vmatpush1.msra.mxu0 0.0
    %1858 = vmatprep.subr.mxu0 0.0
    %1859 = vmatpush1.msra.mxu0 0.0
    %1860 = vmatprep.subr.mxu0 0.0
    %1861 = vmatpush1.msra.mxu0 0.0
    %1862 = vmatprep.subr.mxu0 0.0
    %1863 = vmatpush1.msra.mxu0 0.0
    %1864 = vmatprep.subr.mxu0 0.0
    %1865 = vmatpush1.msra.mxu0 0.0
    %1866 = vmatprep.mubr.f32.mxu0 0.0
    %1867 = vmatmul.mubr.f32.gmra.mrb[0].mxu0 %v1797
    %v1868 = vpop.f32.mrb[0].mxu0
    %v1869 = vadd.f32 %v1794, %v1868
    %v1870 = vpop.f32.mrb[0].mxu0
    %1871 = vmatprep.mubr.f32.mxu0 0.0
    %1872 = vmatmul.mubr.f32.gmra.mrb[0].mxu0 %v1800
    %v1873 = vpop.f32.mrb[0].mxu0
    %v1874 = vadd.f32 %v1794, %v1873
    %v1875 = vpop.f32.mrb[0].mxu0
    %1876 = vdwg.mxu0
    %1877 = vst [vmem:[#allocation16] sm:$0xff] %v1869
    %1878 = vst [vmem:[#allocation16 + $0x8] sm:$0xff] %v1874
    // Predicated region
    $region78: #{tpu_custom_call.1} parent=1 // pred_check
      _
    $region79: #{tpu_custom_call.1} parent=1 // pred_check_branch
      %1880 = sbr.rel (0) target = $region81
    $region80: #{tpu_custom_call.1} parent=1 // pred_region
      %s1882 = ssub.s32 256, 256
      %1883 = vsyncadd [#allocation4], %s1882
      %s1884 = sshll.u32 [#allocation16], 4
      %s1885 = int_to_ptr.vmem [resolvable:$true] %s1884
      %1890 = dma.vmem_to_hbm [thread:$0]  %s1885, 256, %s11, [#allocation4], 128, 128, 8
    $region81: #{tpu_custom_call.1} parent=1 // pred_fallthru
      _
    // Predicated region
    $region82: #{tpu_custom_call.1} parent=1 // pred_check
      _
    $region83: #{tpu_custom_call.1} parent=1 // pred_check_branch
      %1892 = sbr.rel (0) target = $region85
    $region84: #{tpu_custom_call.1} parent=1 // pred_region
      %1893 = dma.done [#allocation4], 256
    $region85: #{tpu_custom_call.1} parent=1 // pred_fallthru
      _
    %1894 = vsyncpa [#allocation3], 1
    %1895 = vsyncpa [#allocation6], 1
    %1896 = vsyncpa [#allocation9], 1
    %1897 = vsyncpa [#allocation12], 1
    %1898 = vsyncpa [#allocation15], 1
    %1899 = vsyncpa [#allocation4], 1

</llo_original>
